<compile_context>
chip_gen: v7x
topology: tpu7x:2x2x1
jax: 0.10.0
libtpu: 0.0.40
codegen_flags: <defaults>
</compile_context>

<pallas_src>
import functools

import numpy as np
import jax
import jax.numpy as jnp
from jax import lax
from jax.experimental import pallas as pl
from jax.experimental.pallas import tpu as pltpu

NEG_SLOPE = 0.2
BN_EPS = 1e-5
LANE = 128


def _round_up(x, m):
    return (x + m - 1) // m * m


def _pad_lanes(x, target):
    pad = target - x.shape[-1]
    if pad:
        x = jnp.pad(x, ((0, 0),) * (x.ndim - 1) + ((0, pad),))
    return x


# ----------------------- fused conv + BN + LeakyReLU ------------------------ #

def _conv_bn_lrelu_kernel(z_ref, w0_ref, w1_ref, b_ref, g_ref, beta_ref,
                          o_ref, acc_ref, *, has_bn):
    # z_ref: (B, Lh+1, 2*Cp)   paired, pre-padded input (all in VMEM)
    # w0/w1: (2*Cp, OCp)       kernel taps (0,1) / (2,3), channel-padded
    # o_ref: (B, Lh+2, OCp)    output, written already L-padded for next layer
    B, lh1, _ = z_ref.shape
    Lh = lh1 - 1
    w0 = w0_ref[...]
    w1 = w1_ref[...]
    # Conv as two contiguous-slice matmuls per batch (im2col done at load time
    # from VMEM; no duplicated HBM traffic).  B is small -> static unroll.
    for b in range(B):
        acc_ref[b] = (
            jnp.dot(z_ref[b, pl.ds(0, Lh), :], w0,
                    preferred_element_type=jnp.float32)
            + jnp.dot(z_ref[b, pl.ds(1, Lh), :], w1,
                      preferred_element_type=jnp.float32))
    acc = acc_ref[...] + b_ref[...]                     # (B,Lh,OCp) + (1,1,OCp)
    if has_bn:
        # Training-mode BatchNorm1d: biased stats over the full (B, L) extent.
        cnt = float(B * Lh)
        s = jnp.sum(jnp.sum(acc, axis=1, keepdims=True), axis=0, keepdims=True)
        mean = s / cnt
        d = acc - mean
        s2 = jnp.sum(jnp.sum(d * d, axis=1, keepdims=True), axis=0,
                     keepdims=True)
        var = s2 / cnt
        acc = d * lax.rsqrt(var + BN_EPS) * g_ref[...] + beta_ref[...]
    y = jnp.where(acc >= 0, acc, NEG_SLOPE * acc)       # LeakyReLU(0.2)
    # Emit the next layer's conv padding for free: rows 0 and Lh+1 are zeros.
    o_ref[...] = jnp.zeros_like(o_ref)
    o_ref[:, pl.ds(1, Lh), :] = y.astype(o_ref.dtype)


def conv_bn_lrelu(z, layer, L_out):
    B, lh1, C2 = z.shape
    OCp = layer["ocp"]
    kernel = functools.partial(_conv_bn_lrelu_kernel, has_bn=layer["has_bn"])
    return pl.pallas_call(
        kernel,
        out_shape=jax.ShapeDtypeStruct((B, L_out + 2, OCp), jnp.float32),
        grid=(1,),
        in_specs=[
            pl.BlockSpec((B, lh1, C2), lambda i: (0, 0, 0)),
            pl.BlockSpec((C2, OCp), lambda i: (0, 0)),
            pl.BlockSpec((C2, OCp), lambda i: (0, 0)),
            pl.BlockSpec((1, 1, OCp), lambda i: (0, 0, 0)),
            pl.BlockSpec((1, 1, OCp), lambda i: (0, 0, 0)),
            pl.BlockSpec((1, 1, OCp), lambda i: (0, 0, 0)),
        ],
        out_specs=pl.BlockSpec((B, L_out + 2, OCp), lambda i: (0, 0, 0)),
        scratch_shapes=[pltpu.VMEM((B, L_out, OCp), jnp.float32)],
    )(z, layer["w0"], layer["w1"], layer["bias"], layer["gamma"],
      layer["beta"])


# ------------------------- tiled Linear (K-accum) --------------------------- #

def _linear_kernel(x_ref, w_ref, b_ref, o_ref, acc_ref):
    @pl.when(pl.program_id(2) == 0)
    def _():
        acc_ref[...] = jnp.zeros_like(acc_ref)

    acc_ref[...] += jnp.dot(x_ref[...], w_ref[...],
                            preferred_element_type=jnp.float32)

    @pl.when(pl.program_id(2) == pl.num_programs(2) - 1)
    def _():
        # bias broadcast only once, in the finalize step
        o_ref[...] = (acc_ref[...] + b_ref[...]).astype(o_ref.dtype)


def linear(x, w, b):
    M, K = x.shape
    K2, N = w.shape
    assert K == K2 and N % LANE == 0 and K % LANE == 0
    tn = N if N <= 256 else 256
    if N % tn:
        tn = LANE
    tk = 256 if K % 256 == 0 else LANE
    grid = (1, N // tn, K // tk)       # M (=batch) kept un-tiled; it is tiny
    return pl.pallas_call(
        _linear_kernel,
        out_shape=jax.ShapeDtypeStruct((M, N), jnp.float32),
        grid=grid,
        in_specs=[
            pl.BlockSpec((M, tk), lambda i, j, k: (0, k)),
            pl.BlockSpec((tk, tn), lambda i, j, k: (k, j)),
            pl.BlockSpec((1, tn), lambda i, j, k: (0, j)),
        ],
        out_specs=pl.BlockSpec((M, tn), lambda i, j, k: (0, j)),
        scratch_shapes=[pltpu.VMEM((M, tn), jnp.float32)],
        compiler_params=pltpu.CompilerParams(
            dimension_semantics=("parallel", "parallel", "arbitrary")),
    )(x, w, b.reshape(1, N))


# ----------------------------- params & glue -------------------------------- #

def init_params(key, data_size, input_channel, latent_size):
    layer_num = int(np.log2(data_size)) - 3
    max_channel = data_size * 2
    params = {"convs": [], "bns": []}
    prev = input_channel
    for i in range(layer_num + 1):
        out_ch = max_channel // 2 ** (layer_num - i)
        key, k1, k2 = jax.random.split(key, 3)
        w = jax.random.normal(k1, (out_ch, prev, 4), jnp.float32) * 0.1
        b = jax.random.normal(k2, (out_ch,), jnp.float32) * 0.1
        params["convs"].append((w, b))
        if i > 0:
            params["bns"].append((jnp.ones((out_ch,), jnp.float32),
                                  jnp.zeros((out_ch,), jnp.float32)))
        else:
            params["bns"].append(None)
        prev = out_ch
    key, k1, k2 = jax.random.split(key, 3)
    in_feat = 4 * max_channel                        # final_size * max_channel
    lw = jax.random.normal(k1, (in_feat, latent_size), jnp.float32) * 0.1
    lb = jax.random.normal(k2, (latent_size,), jnp.float32) * 0.1
    params["linear"] = (lw, lb)
    return params


def prepare_params(params, latent_size):
    """Repack PyTorch-layout weights into lane-padded, kernel-ready matrices.
    All reordering/zero-fill is done on the tiny weights, never activations."""
    prepared = {"convs": [], "latent": latent_size}
    for i, (w, b) in enumerate(params["convs"]):
        oc, ic, K = w.shape
        assert K == 4
        icp, ocp = _round_up(ic, LANE), _round_up(oc, LANE)
        # (oc, ic, k) -> (k//2, k%2, ic, oc), zero-padded channels.
        w_t = jnp.transpose(w, (2, 1, 0)).reshape(2, 2, ic, oc)
        wbuf = jnp.zeros((2, 2, icp, ocp), jnp.float32)
        wbuf = wbuf.at[:, :, :ic, :oc].set(w_t)
        bias = jnp.zeros((1, 1, ocp), jnp.float32).at[0, 0, :oc].set(b)
        bn = params["bns"][i]
        if bn is None:
            gamma = jnp.zeros((1, 1, ocp), jnp.float32)
            beta = jnp.zeros((1, 1, ocp), jnp.float32)
            has_bn = False
        else:
            g, bt = bn
            gamma = jnp.zeros((1, 1, ocp), jnp.float32).at[0, 0, :oc].set(g)
            beta = jnp.zeros((1, 1, ocp), jnp.float32).at[0, 0, :oc].set(bt)
            has_bn = True
        prepared["convs"].append(dict(
            w0=wbuf[0].reshape(2 * icp, ocp),     # kernel taps 0,1
            w1=wbuf[1].reshape(2 * icp, ocp),     # kernel taps 2,3
            bias=bias, gamma=gamma, beta=beta,
            icp=icp, ocp=ocp, has_bn=has_bn))
    # Final Linear: fold PyTorch's (B,C,L)->(B,C*L) flatten plus our lane/L
    # padding into a row permutation / zero-fill of the weight matrix.
    lw, lb = params["linear"]
    in_feat, latent = lw.shape
    last_oc = params["convs"][-1][0].shape[0]
    last_ocp = prepared["convs"][-1]["ocp"]
    Lf = in_feat // last_oc                           # final_size (== 4)
    npad = _round_up(latent, LANE)
    lw_r = jnp.transpose(lw.reshape(last_oc, Lf, latent), (1, 0, 2))  # (l,oc,n)
    lw2 = jnp.zeros((Lf + 2, last_ocp, npad), jnp.float32)
    lw2 = lw2.at[1:Lf + 1, :last_oc, :latent].set(lw_r)
    prepared["lw2"] = lw2.reshape((Lf + 2) * last_ocp, npad)
    prepared["lb2"] = jnp.zeros((npad,), jnp.float32).at[:latent].set(lb)
    return prepared


def conv_encoder_forward(prepared, x_ncl):
    B = x_ncl.shape[0]
    icp0 = prepared["convs"][0]["icp"]
    # Only activation transpose/pad in the whole pass: tiny NCL input ->
    # lane-padded channels-last with the conv's L-padding pre-applied.
    x = jnp.transpose(x_ncl, (0, 2, 1))                  # (B, L, C_in)
    x = _pad_lanes(x, icp0)
    x = jnp.pad(x, ((0, 0), (1, 1), (0, 0)))             # (B, L+2, icp0)
    for layer in prepared["convs"]:
        Bq, Lp2, Cp = x.shape
        z = x.reshape(Bq, Lp2 // 2, 2 * Cp)              # free reshape (pairing)
        L_out = Lp2 // 2 - 1
        x = conv_bn_lrelu(z, layer, L_out)               # (B, L_out+2, ocp)
    flat = x.reshape(B, -1)                              # free reshape
    out = linear(flat, prepared["lw2"], prepared["lb2"])
    return out[:, :prepared["latent"]]


# ------------------------------- reference ---------------------------------- #

def _reference_forward(params, x_ncl):
    hp = lax.Precision.HIGHEST
    y = x_ncl
    for i, (w, b) in enumerate(params["convs"]):
        yp = jnp.pad(y, ((0, 0), (0, 0), (1, 1)))
        L_out = (yp.shape[2] - 4) // 2 + 1
        idx = 2 * jnp.arange(L_out)[:, None] + jnp.arange(4)[None, :]
        patches = yp[:, :, idx]                          # (B, C, L_out, 4)
        z = jnp.einsum("bclk,ock->bol", patches, w, precision=hp) \
            + b[None, :, None]
        if params["bns"][i] is not None:
            g, bt = params["bns"][i]
            mean = jnp.mean(z, axis=(0, 2), keepdims=True)
            var = jnp.mean((z - mean) ** 2, axis=(0, 2), keepdims=True)
            z = (z - mean) / jnp.sqrt(var + BN_EPS) * g[None, :, None] \
                + bt[None, :, None]
        y = jnp.where(z >= 0, z, NEG_SLOPE * z)
    lw, lb = params["linear"]
    flat = y.reshape(y.shape[0], -1)
    return jnp.dot(flat, lw, precision=hp) + lb


# --------------------------------- main -------------------------------------- #

if __name__ == "__main__":
    data_size, input_channel, latent_size = 16, 4, 32   # 2 conv layers, BN on 2nd
    batch = 2
    key = jax.random.PRNGKey(0)
    kx, kp = jax.random.split(key)
    x = jax.random.normal(kx, (batch, input_channel, data_size), jnp.float32)
    params = init_params(kp, data_size, input_channel, latent_size)
    prepared = prepare_params(params, latent_size)

    fwd = jax.jit(functools.partial(conv_encoder_forward, prepared))
    out = fwd(x)
    jax.block_until_ready(out)

    assert out.shape == (batch, latent_size), out.shape
    assert bool(jnp.all(jnp.isfinite(out)))
    ref = _reference_forward(params, x)
    assert bool(jnp.allclose(out, ref, rtol=2e-3, atol=2e-3)), \
        float(jnp.max(jnp.abs(out - ref)))
    print("KERNEL_OK")
</pallas_src>

<mosaic_0001>
module attributes {stable_mosaic.version = 11 : i64} {
  func.func @_conv_bn_lrelu_kernel(%arg0: i32, %arg1: memref<2x9x256xf32, #tpu.memory_space<vmem>>, %arg2: memref<256x128xf32, #tpu.memory_space<vmem>>, %arg3: memref<256x128xf32, #tpu.memory_space<vmem>>, %arg4: memref<1x1x128xf32, #tpu.memory_space<vmem>>, %arg5: memref<1x1x128xf32, #tpu.memory_space<vmem>>, %arg6: memref<1x1x128xf32, #tpu.memory_space<vmem>>, %arg7: memref<2x10x128xf32, #tpu.memory_space<vmem>>, %arg8: memref<2x8x128xf32, #tpu.memory_space<vmem>>) attributes {dimension_semantics = [#tpu.dimension_semantics<arbitrary>], iteration_bounds = array<i64: 1>, scalar_prefetch = 0 : i64, scratch_operands = 1 : i64, tpu.core_type = #tpu.core_type<tc>, window_params = [{pipeline_mode = #tpu.pipeline_mode<synchronous>, transform_indices = @transform_0, window_bounds = array<i64: 2, 9, 256>}, {pipeline_mode = #tpu.pipeline_mode<synchronous>, transform_indices = @transform_1, window_bounds = array<i64: 256, 128>}, {pipeline_mode = #tpu.pipeline_mode<synchronous>, transform_indices = @transform_2, window_bounds = array<i64: 256, 128>}, {pipeline_mode = #tpu.pipeline_mode<synchronous>, transform_indices = @transform_3, window_bounds = array<i64: 1, 1, 128>}, {pipeline_mode = #tpu.pipeline_mode<synchronous>, transform_indices = @transform_4, window_bounds = array<i64: 1, 1, 128>}, {pipeline_mode = #tpu.pipeline_mode<synchronous>, transform_indices = @transform_5, window_bounds = array<i64: 1, 1, 128>}, {pipeline_mode = #tpu.pipeline_mode<synchronous>, transform_indices = @transform_6, window_bounds = array<i64: 2, 10, 128>}]} {
    %c0 = arith.constant 0 : index
    %c0_0 = arith.constant 0 : index
    %0 = vector.load %arg2[%c0, %c0_0] : memref<256x128xf32, #tpu.memory_space<vmem>>, vector<256x128xf32>
    %c0_1 = arith.constant 0 : index
    %c0_2 = arith.constant 0 : index
    %1 = vector.load %arg3[%c0_1, %c0_2] : memref<256x128xf32, #tpu.memory_space<vmem>>, vector<256x128xf32>
    %c0_3 = arith.constant 0 : index
    %c0_4 = arith.constant 0 : index
    %c0_5 = arith.constant 0 : index
    %2 = vector.load %arg1[%c0_3, %c0_4, %c0_5] : memref<2x9x256xf32, #tpu.memory_space<vmem>>, vector<1x8x256xf32>
    %3 = vector.shape_cast %2 : vector<1x8x256xf32> to vector<8x256xf32>
    %cst = arith.constant dense<0.000000e+00> : vector<8x128xf32>
    %4 = tpu.matmul %3, %0, %cst {dimension_numbers = #tpu.dot_dimension_numbers<[1], [0], [0], [1], [0, 0, 1, 1], [], []>} : vector<8x256xf32>, vector<256x128xf32>, vector<8x128xf32> -> vector<8x128xf32>
    %c0_6 = arith.constant 0 : index
    %c1 = arith.constant 1 : index
    %c0_7 = arith.constant 0 : index
    %5 = vector.load %arg1[%c0_6, %c1, %c0_7] : memref<2x9x256xf32, #tpu.memory_space<vmem>>, vector<1x8x256xf32>
    %6 = vector.shape_cast %5 : vector<1x8x256xf32> to vector<8x256xf32>
    %cst_8 = arith.constant dense<0.000000e+00> : vector<8x128xf32>
    %7 = tpu.matmul %6, %1, %cst_8 {dimension_numbers = #tpu.dot_dimension_numbers<[1], [0], [0], [1], [0, 0, 1, 1], [], []>} : vector<8x256xf32>, vector<256x128xf32>, vector<8x128xf32> -> vector<8x128xf32>
    %8 = arith.addf %4, %7 : vector<8x128xf32>
    %c0_9 = arith.constant 0 : index
    %c0_10 = arith.constant 0 : index
    %c0_11 = arith.constant 0 : index
    %9 = vector.load %arg8[%c0_9, %c0_10, %c0_11] : memref<2x8x128xf32, #tpu.memory_space<vmem>>, vector<1x8x128xf32>
    %10 = vector.shape_cast %9 : vector<1x8x128xf32> to vector<8x128xf32>
    %11 = vector.shape_cast %8 : vector<8x128xf32> to vector<1x8x128xf32>
    tpu.vector_store %arg8[%c0_9, %c0_10, %c0_11], %11 {strides = array<i32>} : memref<2x8x128xf32, #tpu.memory_space<vmem>>, vector<1x8x128xf32>,
    %c1_12 = arith.constant 1 : index
    %c0_13 = arith.constant 0 : index
    %c0_14 = arith.constant 0 : index
    %12 = vector.load %arg1[%c1_12, %c0_13, %c0_14] : memref<2x9x256xf32, #tpu.memory_space<vmem>>, vector<1x8x256xf32>
    %13 = vector.shape_cast %12 : vector<1x8x256xf32> to vector<8x256xf32>
    %cst_15 = arith.constant dense<0.000000e+00> : vector<8x128xf32>
    %14 = tpu.matmul %13, %0, %cst_15 {dimension_numbers = #tpu.dot_dimension_numbers<[1], [0], [0], [1], [0, 0, 1, 1], [], []>} : vector<8x256xf32>, vector<256x128xf32>, vector<8x128xf32> -> vector<8x128xf32>
    %c1_16 = arith.constant 1 : index
    %c1_17 = arith.constant 1 : index
    %c0_18 = arith.constant 0 : index
    %15 = vector.load %arg1[%c1_16, %c1_17, %c0_18] : memref<2x9x256xf32, #tpu.memory_space<vmem>>, vector<1x8x256xf32>
    %16 = vector.shape_cast %15 : vector<1x8x256xf32> to vector<8x256xf32>
    %cst_19 = arith.constant dense<0.000000e+00> : vector<8x128xf32>
    %17 = tpu.matmul %16, %1, %cst_19 {dimension_numbers = #tpu.dot_dimension_numbers<[1], [0], [0], [1], [0, 0, 1, 1], [], []>} : vector<8x256xf32>, vector<256x128xf32>, vector<8x128xf32> -> vector<8x128xf32>
    %18 = arith.addf %14, %17 : vector<8x128xf32>
    %c1_20 = arith.constant 1 : index
    %c0_21 = arith.constant 0 : index
    %c0_22 = arith.constant 0 : index
    %19 = vector.load %arg8[%c1_20, %c0_21, %c0_22] : memref<2x8x128xf32, #tpu.memory_space<vmem>>, vector<1x8x128xf32>
    %20 = vector.shape_cast %19 : vector<1x8x128xf32> to vector<8x128xf32>
    %21 = vector.shape_cast %18 : vector<8x128xf32> to vector<1x8x128xf32>
    tpu.vector_store %arg8[%c1_20, %c0_21, %c0_22], %21 {strides = array<i32>} : memref<2x8x128xf32, #tpu.memory_space<vmem>>, vector<1x8x128xf32>,
    %c0_23 = arith.constant 0 : index
    %c0_24 = arith.constant 0 : index
    %c0_25 = arith.constant 0 : index
    %22 = vector.load %arg8[%c0_23, %c0_24, %c0_25] : memref<2x8x128xf32, #tpu.memory_space<vmem>>, vector<2x8x128xf32>
    %c0_26 = arith.constant 0 : index
    %c0_27 = arith.constant 0 : index
    %c0_28 = arith.constant 0 : index
    %23 = vector.load %arg4[%c0_26, %c0_27, %c0_28] : memref<1x1x128xf32, #tpu.memory_space<vmem>>, vector<1x1x128xf32>
    %24 = vector.broadcast %23 : vector<1x1x128xf32> to vector<2x8x128xf32>
    %25 = arith.addf %22, %24 : vector<2x8x128xf32>
    %cst_29 = arith.constant 0.000000e+00 : f32
    %26 = vector.broadcast %cst_29 : f32 to vector<2x8x128xf32>
    %27 = arith.cmpf oge, %25, %26 : vector<2x8x128xf32>
    %cst_30 = arith.constant 2.000000e-01 : f32
    %28 = vector.broadcast %cst_30 : f32 to vector<2x8x128xf32>
    %29 = arith.mulf %28, %25 : vector<2x8x128xf32>
    %30 = arith.select %27, %25, %29 : vector<2x8x128xi1>, vector<2x8x128xf32>
    %cst_31 = arith.constant 0.000000e+00 : f32
    %31 = vector.broadcast %cst_31 : f32 to vector<2x10x128xf32>
    %c0_32 = arith.constant 0 : index
    %c0_33 = arith.constant 0 : index
    %c0_34 = arith.constant 0 : index
    %32 = vector.load %arg7[%c0_32, %c0_33, %c0_34] : memref<2x10x128xf32, #tpu.memory_space<vmem>>, vector<2x10x128xf32>
    tpu.vector_store %arg7[%c0_32, %c0_33, %c0_34], %31 {strides = array<i32>} : memref<2x10x128xf32, #tpu.memory_space<vmem>>, vector<2x10x128xf32>,
    %c0_35 = arith.constant 0 : index
    %c1_36 = arith.constant 1 : index
    %c0_37 = arith.constant 0 : index
    %33 = vector.load %arg7[%c0_35, %c1_36, %c0_37] : memref<2x10x128xf32, #tpu.memory_space<vmem>>, vector<2x8x128xf32>
    tpu.vector_store %arg7[%c0_35, %c1_36, %c0_37], %30 {strides = array<i32>} : memref<2x10x128xf32, #tpu.memory_space<vmem>>, vector<2x8x128xf32>,
    return
  }
  func.func @transform_0(%arg0: i32) -> (i32, i32, i32) {
    %c0_i32 = arith.constant 0 : i32
    %c0_i32_0 = arith.constant 0 : i32
    %c0_i32_1 = arith.constant 0 : i32
    %c0_i32_2 = arith.constant 0 : i32
    return %c0_i32, %c0_i32_0, %c0_i32_1 : i32, i32, i32
  }
  func.func @transform_1(%arg0: i32) -> (i32, i32) {
    %c0_i32 = arith.constant 0 : i32
    %c0_i32_0 = arith.constant 0 : i32
    %c0_i32_1 = arith.constant 0 : i32
    return %c0_i32, %c0_i32_0 : i32, i32
  }
  func.func @transform_2(%arg0: i32) -> (i32, i32) {
    %c0_i32 = arith.constant 0 : i32
    %c0_i32_0 = arith.constant 0 : i32
    %c0_i32_1 = arith.constant 0 : i32
    return %c0_i32, %c0_i32_0 : i32, i32
  }
  func.func @transform_3(%arg0: i32) -> (i32, i32, i32) {
    %c0_i32 = arith.constant 0 : i32
    %c0_i32_0 = arith.constant 0 : i32
    %c0_i32_1 = arith.constant 0 : i32
    %c0_i32_2 = arith.constant 0 : i32
    return %c0_i32, %c0_i32_0, %c0_i32_1 : i32, i32, i32
  }
  func.func @transform_4(%arg0: i32) -> (i32, i32, i32) {
    %c0_i32 = arith.constant 0 : i32
    %c0_i32_0 = arith.constant 0 : i32
    %c0_i32_1 = arith.constant 0 : i32
    %c0_i32_2 = arith.constant 0 : i32
    return %c0_i32, %c0_i32_0, %c0_i32_1 : i32, i32, i32
  }
  func.func @transform_5(%arg0: i32) -> (i32, i32, i32) {
    %c0_i32 = arith.constant 0 : i32
    %c0_i32_0 = arith.constant 0 : i32
    %c0_i32_1 = arith.constant 0 : i32
    %c0_i32_2 = arith.constant 0 : i32
    return %c0_i32, %c0_i32_0, %c0_i32_1 : i32, i32, i32
  }
  func.func @transform_6(%arg0: i32) -> (i32, i32, i32) {
    %c0_i32 = arith.constant 0 : i32
    %c0_i32_0 = arith.constant 0 : i32
    %c0_i32_1 = arith.constant 0 : i32
    %c0_i32_2 = arith.constant 0 : i32
    return %c0_i32, %c0_i32_0, %c0_i32_1 : i32, i32, i32
  }
}

module attributes {stable_mosaic.version = 11 : i64} {
  func.func @_conv_bn_lrelu_kernel(%arg0: i32, %arg1: memref<2x5x256xf32, #tpu.memory_space<vmem>>, %arg2: memref<256x128xf32, #tpu.memory_space<vmem>>, %arg3: memref<256x128xf32, #tpu.memory_space<vmem>>, %arg4: memref<1x1x128xf32, #tpu.memory_space<vmem>>, %arg5: memref<1x1x128xf32, #tpu.memory_space<vmem>>, %arg6: memref<1x1x128xf32, #tpu.memory_space<vmem>>, %arg7: memref<2x6x128xf32, #tpu.memory_space<vmem>>, %arg8: memref<2x4x128xf32, #tpu.memory_space<vmem>>) attributes {dimension_semantics = [#tpu.dimension_semantics<arbitrary>], iteration_bounds = array<i64: 1>, scalar_prefetch = 0 : i64, scratch_operands = 1 : i64, tpu.core_type = #tpu.core_type<tc>, window_params = [{pipeline_mode = #tpu.pipeline_mode<synchronous>, transform_indices = @transform_0, window_bounds = array<i64: 2, 5, 256>}, {pipeline_mode = #tpu.pipeline_mode<synchronous>, transform_indices = @transform_1, window_bounds = array<i64: 256, 128>}, {pipeline_mode = #tpu.pipeline_mode<synchronous>, transform_indices = @transform_2, window_bounds = array<i64: 256, 128>}, {pipeline_mode = #tpu.pipeline_mode<synchronous>, transform_indices = @transform_3, window_bounds = array<i64: 1, 1, 128>}, {pipeline_mode = #tpu.pipeline_mode<synchronous>, transform_indices = @transform_4, window_bounds = array<i64: 1, 1, 128>}, {pipeline_mode = #tpu.pipeline_mode<synchronous>, transform_indices = @transform_5, window_bounds = array<i64: 1, 1, 128>}, {pipeline_mode = #tpu.pipeline_mode<synchronous>, transform_indices = @transform_6, window_bounds = array<i64: 2, 6, 128>}]} {
    %c0 = arith.constant 0 : index
    %c0_0 = arith.constant 0 : index
    %0 = vector.load %arg2[%c0, %c0_0] : memref<256x128xf32, #tpu.memory_space<vmem>>, vector<256x128xf32>
    %c0_1 = arith.constant 0 : index
    %c0_2 = arith.constant 0 : index
    %1 = vector.load %arg3[%c0_1, %c0_2] : memref<256x128xf32, #tpu.memory_space<vmem>>, vector<256x128xf32>
    %c0_3 = arith.constant 0 : index
    %c0_4 = arith.constant 0 : index
    %c0_5 = arith.constant 0 : index
    %2 = vector.load %arg1[%c0_3, %c0_4, %c0_5] : memref<2x5x256xf32, #tpu.memory_space<vmem>>, vector<1x4x256xf32>
    %3 = vector.shape_cast %2 : vector<1x4x256xf32> to vector<4x256xf32>
    %cst = arith.constant dense<0.000000e+00> : vector<4x128xf32>
    %4 = tpu.matmul %3, %0, %cst {dimension_numbers = #tpu.dot_dimension_numbers<[1], [0], [0], [1], [0, 0, 1, 1], [], []>} : vector<4x256xf32>, vector<256x128xf32>, vector<4x128xf32> -> vector<4x128xf32>
    %c0_6 = arith.constant 0 : index
    %c1 = arith.constant 1 : index
    %c0_7 = arith.constant 0 : index
    %5 = vector.load %arg1[%c0_6, %c1, %c0_7] : memref<2x5x256xf32, #tpu.memory_space<vmem>>, vector<1x4x256xf32>
    %6 = vector.shape_cast %5 : vector<1x4x256xf32> to vector<4x256xf32>
    %cst_8 = arith.constant dense<0.000000e+00> : vector<4x128xf32>
    %7 = tpu.matmul %6, %1, %cst_8 {dimension_numbers = #tpu.dot_dimension_numbers<[1], [0], [0], [1], [0, 0, 1, 1], [], []>} : vector<4x256xf32>, vector<256x128xf32>, vector<4x128xf32> -> vector<4x128xf32>
    %8 = arith.addf %4, %7 : vector<4x128xf32>
    %c0_9 = arith.constant 0 : index
    %c0_10 = arith.constant 0 : index
    %c0_11 = arith.constant 0 : index
    %9 = vector.load %arg8[%c0_9, %c0_10, %c0_11] : memref<2x4x128xf32, #tpu.memory_space<vmem>>, vector<1x4x128xf32>
    %10 = vector.shape_cast %9 : vector<1x4x128xf32> to vector<4x128xf32>
    %11 = vector.shape_cast %8 : vector<4x128xf32> to vector<1x4x128xf32>
    tpu.vector_store %arg8[%c0_9, %c0_10, %c0_11], %11 {strides = array<i32>} : memref<2x4x128xf32, #tpu.memory_space<vmem>>, vector<1x4x128xf32>,
    %c1_12 = arith.constant 1 : index
    %c0_13 = arith.constant 0 : index
    %c0_14 = arith.constant 0 : index
    %12 = vector.load %arg1[%c1_12, %c0_13, %c0_14] : memref<2x5x256xf32, #tpu.memory_space<vmem>>, vector<1x4x256xf32>
    %13 = vector.shape_cast %12 : vector<1x4x256xf32> to vector<4x256xf32>
    %cst_15 = arith.constant dense<0.000000e+00> : vector<4x128xf32>
    %14 = tpu.matmul %13, %0, %cst_15 {dimension_numbers = #tpu.dot_dimension_numbers<[1], [0], [0], [1], [0, 0, 1, 1], [], []>} : vector<4x256xf32>, vector<256x128xf32>, vector<4x128xf32> -> vector<4x128xf32>
    %c1_16 = arith.constant 1 : index
    %c1_17 = arith.constant 1 : index
    %c0_18 = arith.constant 0 : index
    %15 = vector.load %arg1[%c1_16, %c1_17, %c0_18] : memref<2x5x256xf32, #tpu.memory_space<vmem>>, vector<1x4x256xf32>
    %16 = vector.shape_cast %15 : vector<1x4x256xf32> to vector<4x256xf32>
    %cst_19 = arith.constant dense<0.000000e+00> : vector<4x128xf32>
    %17 = tpu.matmul %16, %1, %cst_19 {dimension_numbers = #tpu.dot_dimension_numbers<[1], [0], [0], [1], [0, 0, 1, 1], [], []>} : vector<4x256xf32>, vector<256x128xf32>, vector<4x128xf32> -> vector<4x128xf32>
    %18 = arith.addf %14, %17 : vector<4x128xf32>
    %c1_20 = arith.constant 1 : index
    %c0_21 = arith.constant 0 : index
    %c0_22 = arith.constant 0 : index
    %19 = vector.load %arg8[%c1_20, %c0_21, %c0_22] : memref<2x4x128xf32, #tpu.memory_space<vmem>>, vector<1x4x128xf32>
    %20 = vector.shape_cast %19 : vector<1x4x128xf32> to vector<4x128xf32>
    %21 = vector.shape_cast %18 : vector<4x128xf32> to vector<1x4x128xf32>
    tpu.vector_store %arg8[%c1_20, %c0_21, %c0_22], %21 {strides = array<i32>} : memref<2x4x128xf32, #tpu.memory_space<vmem>>, vector<1x4x128xf32>,
    %c0_23 = arith.constant 0 : index
    %c0_24 = arith.constant 0 : index
    %c0_25 = arith.constant 0 : index
    %22 = vector.load %arg8[%c0_23, %c0_24, %c0_25] : memref<2x4x128xf32, #tpu.memory_space<vmem>>, vector<2x4x128xf32>
    %c0_26 = arith.constant 0 : index
    %c0_27 = arith.constant 0 : index
    %c0_28 = arith.constant 0 : index
    %23 = vector.load %arg4[%c0_26, %c0_27, %c0_28] : memref<1x1x128xf32, #tpu.memory_space<vmem>>, vector<1x1x128xf32>
    %24 = vector.broadcast %23 : vector<1x1x128xf32> to vector<2x4x128xf32>
    %25 = arith.addf %22, %24 : vector<2x4x128xf32>
    %cst_29 = arith.constant dense<0.000000e+00> : vector<2x128xf32>
    %26 = vector.multi_reduction <add>, %25, %cst_29 [1] : vector<2x4x128xf32> to vector<2x128xf32>
    %27 = vector.shape_cast %26 : vector<2x128xf32> to vector<2x1x128xf32>
    %cst_30 = arith.constant dense<0.000000e+00> : vector<1x128xf32>
    %28 = vector.multi_reduction <add>, %27, %cst_30 [0] : vector<2x1x128xf32> to vector<1x128xf32>
    %29 = vector.shape_cast %28 : vector<1x128xf32> to vector<1x1x128xf32>
    %cst_31 = arith.constant 8.000000e+00 : f32
    %30 = vector.broadcast %cst_31 : f32 to vector<1x1x128xf32>
    %31 = arith.divf %29, %30 : vector<1x1x128xf32>
    %32 = vector.broadcast %31 : vector<1x1x128xf32> to vector<2x4x128xf32>
    %33 = arith.subf %25, %32 : vector<2x4x128xf32>
    %34 = arith.mulf %33, %33 : vector<2x4x128xf32>
    %cst_32 = arith.constant dense<0.000000e+00> : vector<2x128xf32>
    %35 = vector.multi_reduction <add>, %34, %cst_32 [1] : vector<2x4x128xf32> to vector<2x128xf32>
    %36 = vector.shape_cast %35 : vector<2x128xf32> to vector<2x1x128xf32>
    %cst_33 = arith.constant dense<0.000000e+00> : vector<1x128xf32>
    %37 = vector.multi_reduction <add>, %36, %cst_33 [0] : vector<2x1x128xf32> to vector<1x128xf32>
    %38 = vector.shape_cast %37 : vector<1x128xf32> to vector<1x1x128xf32>
    %cst_34 = arith.constant 8.000000e+00 : f32
    %39 = vector.broadcast %cst_34 : f32 to vector<1x1x128xf32>
    %40 = arith.divf %38, %39 : vector<1x1x128xf32>
    %cst_35 = arith.constant 9.99999974E-6 : f32
    %41 = vector.broadcast %cst_35 : f32 to vector<1x1x128xf32>
    %42 = arith.addf %40, %41 : vector<1x1x128xf32>
    %43 = math.rsqrt %42 : vector<1x1x128xf32>
    %44 = vector.broadcast %43 : vector<1x1x128xf32> to vector<2x4x128xf32>
    %45 = arith.mulf %33, %44 : vector<2x4x128xf32>
    %c0_36 = arith.constant 0 : index
    %c0_37 = arith.constant 0 : index
    %c0_38 = arith.constant 0 : index
    %46 = vector.load %arg5[%c0_36, %c0_37, %c0_38] : memref<1x1x128xf32, #tpu.memory_space<vmem>>, vector<1x1x128xf32>
    %47 = vector.broadcast %46 : vector<1x1x128xf32> to vector<2x4x128xf32>
    %48 = arith.mulf %45, %47 : vector<2x4x128xf32>
    %c0_39 = arith.constant 0 : index
    %c0_40 = arith.constant 0 : index
    %c0_41 = arith.constant 0 : index
    %49 = vector.load %arg6[%c0_39, %c0_40, %c0_41] : memref<1x1x128xf32, #tpu.memory_space<vmem>>, vector<1x1x128xf32>
    %50 = vector.broadcast %49 : vector<1x1x128xf32> to vector<2x4x128xf32>
    %51 = arith.addf %48, %50 : vector<2x4x128xf32>
    %cst_42 = arith.constant 0.000000e+00 : f32
    %52 = vector.broadcast %cst_42 : f32 to vector<2x4x128xf32>
    %53 = arith.cmpf oge, %51, %52 : vector<2x4x128xf32>
    %cst_43 = arith.constant 2.000000e-01 : f32
    %54 = vector.broadcast %cst_43 : f32 to vector<2x4x128xf32>
    %55 = arith.mulf %54, %51 : vector<2x4x128xf32>
    %56 = arith.select %53, %51, %55 : vector<2x4x128xi1>, vector<2x4x128xf32>
    %cst_44 = arith.constant 0.000000e+00 : f32
    %57 = vector.broadcast %cst_44 : f32 to vector<2x6x128xf32>
    %c0_45 = arith.constant 0 : index
    %c0_46 = arith.constant 0 : index
    %c0_47 = arith.constant 0 : index
    %58 = vector.load %arg7[%c0_45, %c0_46, %c0_47] : memref<2x6x128xf32, #tpu.memory_space<vmem>>, vector<2x6x128xf32>
    tpu.vector_store %arg7[%c0_45, %c0_46, %c0_47], %57 {strides = array<i32>} : memref<2x6x128xf32, #tpu.memory_space<vmem>>, vector<2x6x128xf32>,
    %c0_48 = arith.constant 0 : index
    %c1_49 = arith.constant 1 : index
    %c0_50 = arith.constant 0 : index
    %59 = vector.load %arg7[%c0_48, %c1_49, %c0_50] : memref<2x6x128xf32, #tpu.memory_space<vmem>>, vector<2x4x128xf32>
    tpu.vector_store %arg7[%c0_48, %c1_49, %c0_50], %56 {strides = array<i32>} : memref<2x6x128xf32, #tpu.memory_space<vmem>>, vector<2x4x128xf32>,
    return
  }
  func.func @transform_0(%arg0: i32) -> (i32, i32, i32) {
    %c0_i32 = arith.constant 0 : i32
    %c0_i32_0 = arith.constant 0 : i32
    %c0_i32_1 = arith.constant 0 : i32
    %c0_i32_2 = arith.constant 0 : i32
    return %c0_i32, %c0_i32_0, %c0_i32_1 : i32, i32, i32
  }
  func.func @transform_1(%arg0: i32) -> (i32, i32) {
    %c0_i32 = arith.constant 0 : i32
    %c0_i32_0 = arith.constant 0 : i32
    %c0_i32_1 = arith.constant 0 : i32
    return %c0_i32, %c0_i32_0 : i32, i32
  }
  func.func @transform_2(%arg0: i32) -> (i32, i32) {
    %c0_i32 = arith.constant 0 : i32
    %c0_i32_0 = arith.constant 0 : i32
    %c0_i32_1 = arith.constant 0 : i32
    return %c0_i32, %c0_i32_0 : i32, i32
  }
  func.func @transform_3(%arg0: i32) -> (i32, i32, i32) {
    %c0_i32 = arith.constant 0 : i32
    %c0_i32_0 = arith.constant 0 : i32
    %c0_i32_1 = arith.constant 0 : i32
    %c0_i32_2 = arith.constant 0 : i32
    return %c0_i32, %c0_i32_0, %c0_i32_1 : i32, i32, i32
  }
  func.func @transform_4(%arg0: i32) -> (i32, i32, i32) {
    %c0_i32 = arith.constant 0 : i32
    %c0_i32_0 = arith.constant 0 : i32
    %c0_i32_1 = arith.constant 0 : i32
    %c0_i32_2 = arith.constant 0 : i32
    return %c0_i32, %c0_i32_0, %c0_i32_1 : i32, i32, i32
  }
  func.func @transform_5(%arg0: i32) -> (i32, i32, i32) {
    %c0_i32 = arith.constant 0 : i32
    %c0_i32_0 = arith.constant 0 : i32
    %c0_i32_1 = arith.constant 0 : i32
    %c0_i32_2 = arith.constant 0 : i32
    return %c0_i32, %c0_i32_0, %c0_i32_1 : i32, i32, i32
  }
  func.func @transform_6(%arg0: i32) -> (i32, i32, i32) {
    %c0_i32 = arith.constant 0 : i32
    %c0_i32_0 = arith.constant 0 : i32
    %c0_i32_1 = arith.constant 0 : i32
    %c0_i32_2 = arith.constant 0 : i32
    return %c0_i32, %c0_i32_0, %c0_i32_1 : i32, i32, i32
  }
}

module attributes {stable_mosaic.version = 11 : i64} {
  func.func @_linear_kernel(%arg0: i32, %arg1: i32, %arg2: i32, %arg3: memref<2x256xf32, #tpu.memory_space<vmem>>, %arg4: memref<256x128xf32, #tpu.memory_space<vmem>>, %arg5: memref<1x128xf32, #tpu.memory_space<vmem>>, %arg6: memref<2x128xf32, #tpu.memory_space<vmem>>, %arg7: memref<2x128xf32, #tpu.memory_space<vmem>>) attributes {dimension_semantics = [#tpu.dimension_semantics<parallel>, #tpu.dimension_semantics<parallel>, #tpu.dimension_semantics<arbitrary>], iteration_bounds = array<i64: 1, 1, 3>, scalar_prefetch = 0 : i64, scratch_operands = 1 : i64, tpu.core_type = #tpu.core_type<tc>, window_params = [{transform_indices = @transform_0, window_bounds = array<i64: 2, 256>}, {transform_indices = @transform_1, window_bounds = array<i64: 256, 128>}, {transform_indices = @transform_2, window_bounds = array<i64: 1, 128>}, {transform_indices = @transform_3, window_bounds = array<i64: 2, 128>}]} {
    %c0_i32 = arith.constant 0 : i32
    %0 = arith.cmpi eq, %arg2, %c0_i32 : i32
    %1 = arith.extui %0 : i1 to i32
    %c0_i32_0 = arith.constant 0 : i32
    %2 = arith.cmpi ne, %1, %c0_i32_0 : i32
    scf.if %2 {
      %cst_9 = arith.constant 0.000000e+00 : f32
      %12 = vector.broadcast %cst_9 : f32 to vector<2x128xf32>
      %c0_10 = arith.constant 0 : index
      %c0_11 = arith.constant 0 : index
      %13 = vector.load %arg7[%c0_10, %c0_11] : memref<2x128xf32, #tpu.memory_space<vmem>>, vector<2x128xf32>
      tpu.vector_store %arg7[%c0_10, %c0_11], %12 {strides = array<i32>} : memref<2x128xf32, #tpu.memory_space<vmem>>, vector<2x128xf32>,
    } else {
    }
    %c0 = arith.constant 0 : index
    %c0_1 = arith.constant 0 : index
    %3 = vector.load %arg7[%c0, %c0_1] : memref<2x128xf32, #tpu.memory_space<vmem>>, vector<2x128xf32>
    %c0_2 = arith.constant 0 : index
    %c0_3 = arith.constant 0 : index
    %4 = vector.load %arg3[%c0_2, %c0_3] : memref<2x256xf32, #tpu.memory_space<vmem>>, vector<2x256xf32>
    %c0_4 = arith.constant 0 : index
    %c0_5 = arith.constant 0 : index
    %5 = vector.load %arg4[%c0_4, %c0_5] : memref<256x128xf32, #tpu.memory_space<vmem>>, vector<256x128xf32>
    %cst = arith.constant dense<0.000000e+00> : vector<2x128xf32>
    %6 = tpu.matmul %4, %5, %cst {dimension_numbers = #tpu.dot_dimension_numbers<[1], [0], [0], [1], [0, 0, 1, 1], [], []>} : vector<2x256xf32>, vector<256x128xf32>, vector<2x128xf32> -> vector<2x128xf32>
    %7 = arith.addf %3, %6 : vector<2x128xf32>
    %c0_6 = arith.constant 0 : index
    %c0_7 = arith.constant 0 : index
    %8 = vector.load %arg7[%c0_6, %c0_7] : memref<2x128xf32, #tpu.memory_space<vmem>>, vector<2x128xf32>
    tpu.vector_store %arg7[%c0_6, %c0_7], %7 {strides = array<i32>} : memref<2x128xf32, #tpu.memory_space<vmem>>, vector<2x128xf32>,
    %c2_i32 = arith.constant 2 : i32
    %9 = arith.cmpi eq, %arg2, %c2_i32 : i32
    %10 = arith.extui %9 : i1 to i32
    %c0_i32_8 = arith.constant 0 : i32
    %11 = arith.cmpi ne, %10, %c0_i32_8 : i32
    scf.if %11 {
      %c0_9 = arith.constant 0 : index
      %c0_10 = arith.constant 0 : index
      %12 = vector.load %arg7[%c0_9, %c0_10] : memref<2x128xf32, #tpu.memory_space<vmem>>, vector<2x128xf32>
      %c0_11 = arith.constant 0 : index
      %c0_12 = arith.constant 0 : index
      %13 = vector.load %arg5[%c0_11, %c0_12] : memref<1x128xf32, #tpu.memory_space<vmem>>, vector<1x128xf32>
      %14 = vector.broadcast %13 : vector<1x128xf32> to vector<2x128xf32>
      %15 = arith.addf %12, %14 : vector<2x128xf32>
      %c0_13 = arith.constant 0 : index
      %c0_14 = arith.constant 0 : index
      %16 = vector.load %arg6[%c0_13, %c0_14] : memref<2x128xf32, #tpu.memory_space<vmem>>, vector<2x128xf32>
      tpu.vector_store %arg6[%c0_13, %c0_14], %15 {strides = array<i32>} : memref<2x128xf32, #tpu.memory_space<vmem>>, vector<2x128xf32>,
    } else {
    }
    return
  }
  func.func @transform_0(%arg0: i32, %arg1: i32, %arg2: i32) -> (i32, i32) {
    %c0_i32 = arith.constant 0 : i32
    %c0_i32_0 = arith.constant 0 : i32
    return %c0_i32, %arg2 : i32, i32
  }
  func.func @transform_1(%arg0: i32, %arg1: i32, %arg2: i32) -> (i32, i32) {
    %c0_i32 = arith.constant 0 : i32
    return %arg2, %arg1 : i32, i32
  }
  func.func @transform_2(%arg0: i32, %arg1: i32, %arg2: i32) -> (i32, i32) {
    %c0_i32 = arith.constant 0 : i32
    %c0_i32_0 = arith.constant 0 : i32
    return %c0_i32, %arg1 : i32, i32
  }
  func.func @transform_3(%arg0: i32, %arg1: i32, %arg2: i32) -> (i32, i32) {
    %c0_i32 = arith.constant 0 : i32
    %c0_i32_0 = arith.constant 0 : i32
    return %c0_i32, %arg1 : i32, i32
  }
}

</mosaic_0001>

<llo_original>
// kernel: conv_encoder_forward.5
$region0: #{conv_encoder_forward.5}
  #allocation0 [shape = 'u32[]', space=smem, size = 0x4, offset = 0x4, fixed_abs, tag = 'smem constant byte address 0x4 - core index']
  #allocation1 [shape = 'u32[144,128]{1,0:T(1,128)}', space=vmem, size = 0x12000, scoped, tag = 'internal scratch']
  #allocation2 [shape = 'f32[2,128]{1,0:T(2,128)}', space=vmem, size = 0x400, scoped, tag = 'scratch operand']
  %s0 = inlined_call_operand.vmem [shape: f32[2,768], index: 0, kind: input, shape index: {}]
  %s1 = inlined_call_operand.vmem [shape: f32[768,128], index: 1, kind: input, shape index: {}]
  %s2 = inlined_call_operand.vmem [shape: f32[1,128], index: 2, kind: input, shape index: {}]
  %s3 = inlined_call_operand.hbm [shape: f32[2,128], index: 3, kind: output, shape index: {}]
  %s4 = sld [smem:[#allocation0]]
  $region53: #{conv_encoder_forward.5} parent=0
    _
  %s6 = ssub.s32 1, %s4
  %s7 = scalar_select 0, %s6, %s4
  $region1: #{conv_encoder_forward.5} parent=0
    #allocation3 [shape = 'u8[1024]{0}', space=vmem, size = 0x400, scoped, tag = 'output window, operand 0, single buffered']
    #allocation4 [shape = 's32[2]{0}', space=sflag, size = 0x8, scoped, tag = 'scoped memory for conv_encoder_forward.5']
    %8 = vsyncpa [#allocation4], 0
    loop: start=0, step=1, limit=5
    $region2: #{conv_encoder_forward.5} parent=1 // loop_pre_header
      _
    $region3: #{conv_encoder_forward.5} parent=1 // loop_header
      %s10 = sphi 0, %s14
      %p11 = scmp.ge.s32.totalorder %s10, 5
      %s17 = sphi 0, %s36
      %s18 = sphi 0, %s32
      %s19 = sphi 0, %s28
      %s20 = sphi 0, %s17
      %s21 = sphi 0, %s18
      %s22 = sphi 0, %s19
      %s23 = sphi 0, %s20
      %s24 = sphi 0, %s21
      %s25 = sphi 0, %s22
      %s39 = sphi 0, %s41
      %s42 = sphi 0, %s39
      %s43 = sphi 0, %s42
      %s59 = sphi 0, %s43
      %s67 = sphi 0, %s69
      %s70 = sphi 0, %s67
      %s71 = sphi 0, %s70
      %s87 = sphi 0, %s71
      %s93 = sphi 0, %s95
      %s96 = sphi 0, %s93
      %s97 = sphi 0, %s96
      %s113 = sphi 0, %s97
      %s119 = sphi 0, %s121
      %s122 = sphi 0, %s119
      %s123 = sphi 0, %s122
      %s139 = sphi 0, %s123
    $region4: #{conv_encoder_forward.5} parent=1 // loop_header_branch
      %13 = sbr.rel (%p11) target = $region8
    $region5: #{conv_encoder_forward.5} parent=1 // loop_body
      %s15 = ssub.s32 %s10, 1
      %s16 = ssub.s32 %s10, 2
      %s26 = sadd.s32 1, %s19
      %p27 = scmp.ge.s32.totalorder %s26, 3
      %s28 = scalar_select %p27, 0, %s26
      %s29 = sadd.s32 1, %s18
      %s30 = scalar_select %p27, %s29, %s18
      %p31 = scmp.ge.s32.totalorder %s30, 1
      %s32 = scalar_select %p31, 0, %s30
      %s33 = sadd.s32 1, %s17
      %s34 = scalar_select %p31, %s33, %s17
      %p35 = scmp.ge.s32.totalorder %s34, 1
      %s36 = scalar_select %p35, 0, %s34
      %s37 = ssub.s32 %s19, %s28
      %p38 = scmp.eq.s32.totalorder %s37, 0
      %s40 = sadd.s32 %s39, 1
      %s41 = scalar_select %p38, %s39, %s40
      %p44 = pneg %p38
      %p45 = scmp.eq.s32.totalorder %s10, 2
      %p46 = por %p44, %p45
      %p47 = scmp.ne.s32.totalorder %s39, %s42
      %p48 = scmp.eq.s32.totalorder %s10, 0
      %p49 = por %p47, %p48
      %p50 = scmp.ne.s32.totalorder %s39, %s42
      %p51 = scmp.eq.s32.totalorder %s15, 2
      %p52 = por %p50, %p51
      %p53 = scmp.ne.s32.totalorder %s42, %s43
      %p54 = scmp.eq.s32.totalorder %s15, 0
      %p55 = por %p53, %p54
      %p56 = scmp.ne.s32.totalorder %s42, %s43
      %p57 = scmp.eq.s32.totalorder %s16, 2
      %p58 = por %p56, %p57
      %p60 = scmp.ne.s32.totalorder %s43, %s59
      %p61 = scmp.eq.s32.totalorder %s16, 0
      %p62 = por %p60, %p61
      %s63 = ssub.s32 %s19, %s28
      %s64 = ssub.s32 %s18, %s32
      %s65 = sor.u32 %s63, %s64
      %p66 = scmp.eq.s32.totalorder %s65, 0
      %s68 = sadd.s32 %s67, 1
      %s69 = scalar_select %p66, %s67, %s68
      %p72 = pneg %p66
      %p73 = scmp.eq.s32.totalorder %s10, 2
      %p74 = por %p72, %p73
      %p75 = scmp.ne.s32.totalorder %s67, %s70
      %p76 = scmp.eq.s32.totalorder %s10, 0
      %p77 = por %p75, %p76
      %p78 = scmp.ne.s32.totalorder %s67, %s70
      %p79 = scmp.eq.s32.totalorder %s15, 2
      %p80 = por %p78, %p79
      %p81 = scmp.ne.s32.totalorder %s70, %s71
      %p82 = scmp.eq.s32.totalorder %s15, 0
      %p83 = por %p81, %p82
      %p84 = scmp.ne.s32.totalorder %s70, %s71
      %p85 = scmp.eq.s32.totalorder %s16, 2
      %p86 = por %p84, %p85
      %p88 = scmp.ne.s32.totalorder %s71, %s87
      %p89 = scmp.eq.s32.totalorder %s16, 0
      %p90 = por %p88, %p89
      %s91 = ssub.s32 %s18, %s32
      %p92 = scmp.eq.s32.totalorder %s91, 0
      %s94 = sadd.s32 %s93, 1
      %s95 = scalar_select %p92, %s93, %s94
      %p98 = pneg %p92
      %p99 = scmp.eq.s32.totalorder %s10, 2
      %p100 = por %p98, %p99
      %p101 = scmp.ne.s32.totalorder %s93, %s96
      %p102 = scmp.eq.s32.totalorder %s10, 0
      %p103 = por %p101, %p102
      %p104 = scmp.ne.s32.totalorder %s93, %s96
      %p105 = scmp.eq.s32.totalorder %s15, 2
      %p106 = por %p104, %p105
      %p107 = scmp.ne.s32.totalorder %s96, %s97
      %p108 = scmp.eq.s32.totalorder %s15, 0
      %p109 = por %p107, %p108
      %p110 = scmp.ne.s32.totalorder %s96, %s97
      %p111 = scmp.eq.s32.totalorder %s16, 2
      %p112 = por %p110, %p111
      %p114 = scmp.ne.s32.totalorder %s97, %s113
      %p115 = scmp.eq.s32.totalorder %s16, 0
      %p116 = por %p114, %p115
      %s117 = ssub.s32 %s18, %s32
      %p118 = scmp.eq.s32.totalorder %s117, 0
      %s120 = sadd.s32 %s119, 1
      %s121 = scalar_select %p118, %s119, %s120
      %p124 = pneg %p118
      %p125 = scmp.eq.s32.totalorder %s10, 2
      %p126 = por %p124, %p125
      %p127 = scmp.ne.s32.totalorder %s119, %s122
      %p128 = scmp.eq.s32.totalorder %s10, 0
      %p129 = por %p127, %p128
      %p130 = scmp.ne.s32.totalorder %s119, %s122
      %p131 = scmp.eq.s32.totalorder %s15, 2
      %p132 = por %p130, %p131
      %p133 = scmp.ne.s32.totalorder %s122, %s123
      %p134 = scmp.eq.s32.totalorder %s15, 0
      %p135 = por %p133, %p134
      %p136 = scmp.ne.s32.totalorder %s122, %s123
      %p137 = scmp.eq.s32.totalorder %s16, 2
      %p138 = por %p136, %p137
      %p140 = scmp.ne.s32.totalorder %s123, %s139
      %p141 = scmp.eq.s32.totalorder %s16, 0
      %p142 = por %p140, %p141
      %p143 = scmp.le.s32.totalorder 1, %s10
      %p144 = scmp.lt.s32.totalorder %s10, 4
      %p145 = pnand %p143, %p144
      %p146 = pneg %p145
      // Predicated region
      $region9: #{conv_encoder_forward.5} parent=5 // pred_check
        _
      $region10: #{conv_encoder_forward.5} parent=5 // pred_check_branch
        %148 = sbr.rel (%p145) target = $region12
      $region11: #{conv_encoder_forward.5} parent=5 // pred_region
        %s149 = ssub.s32 %s10, 1
        // Predicated region
        $region13: #{conv_encoder_forward.5} parent=11 // pred_check
          %p150 = pneg %p109
        $region14: #{conv_encoder_forward.5} parent=11 // pred_check_branch
          %152 = sbr.rel (%p150) target = $region16
        $region15: #{conv_encoder_forward.5} parent=11 // pred_region
          %p153 = scmp.lt.s32.totalorder %s21, 0
          %s154 = scalar_select %p153, %s21, 0
          %s155 = scalar_lea.vmem %s2, %s154
        $region16: #{conv_encoder_forward.5} parent=11 // pred_fallthru
          _
      $region12: #{conv_encoder_forward.5} parent=5 // pred_fallthru
        _
      %p156 = scmp.lt.s32.totalorder %s10, 3
      // Predicated region
      $region17: #{conv_encoder_forward.5} parent=5 // pred_check
        %p157 = pneg %p156
      $region18: #{conv_encoder_forward.5} parent=5 // pred_check_branch
        %159 = sbr.rel (%p157) target = $region20
      $region19: #{conv_encoder_forward.5} parent=5 // pred_region
        // Predicated region
        $region21: #{conv_encoder_forward.5} parent=19 // pred_check
          %p160 = pneg %p49
        $region22: #{conv_encoder_forward.5} parent=19 // pred_check_branch
          %162 = sbr.rel (%p160) target = $region24
        $region23: #{conv_encoder_forward.5} parent=19 // pred_region
          %s163 = smul.u32 2, %s19
          %p164 = scmp.lt.s32.totalorder %s163, 5
          %s165 = scalar_select %p164, %s163, 5
          %s166 = smul.addr %s165, 2
          %s167 = scalar_lea.vmem %s0, %s166
          %s168 = smul.u32 2, %s19
        $region24: #{conv_encoder_forward.5} parent=19 // pred_fallthru
          _
        // Predicated region
        $region25: #{conv_encoder_forward.5} parent=19 // pred_check
          %p169 = pneg %p77
        $region26: #{conv_encoder_forward.5} parent=19 // pred_check_branch
          %171 = sbr.rel (%p169) target = $region28
        $region27: #{conv_encoder_forward.5} parent=19 // pred_region
          %s172 = smul.u32 32, %s19
          %p173 = scmp.lt.s32.totalorder %s172, 95
          %s174 = scalar_select %p173, %s172, 95
          %p175 = scmp.lt.s32.totalorder %s18, 0
          %s176 = scalar_select %p175, %s18, 0
          %s177 = sadd.s32 %s176, %s174
          %s178 = smul.addr %s177, 8
          %s179 = scalar_lea.vmem %s1, %s178
          %s180 = smul.u32 32, %s19
        $region28: #{conv_encoder_forward.5} parent=19 // pred_fallthru
          _
      $region20: #{conv_encoder_forward.5} parent=5 // pred_fallthru
        _
      %p181 = scmp.le.s32.totalorder 1, %s10
      %p182 = scmp.lt.s32.totalorder %s10, 4
      %p183 = pnand %p181, %p182
      %p184 = pneg %p183
      // Predicated region
      $region29: #{conv_encoder_forward.5} parent=5 // pred_check
        _
      $region30: #{conv_encoder_forward.5} parent=5 // pred_check_branch
        %186 = sbr.rel (%p183) target = $region32
      $region31: #{conv_encoder_forward.5} parent=5 // pred_region
        %s187 = ssub.s32 %s10, 1
        %s188 = smul.u32 2, %s22
        %p189 = scmp.lt.s32.totalorder %s188, 5
        %s190 = scalar_select %p189, %s188, 5
        %s191 = smul.addr %s190, 2
        %s192 = scalar_lea.vmem %s0, %s191
        %p193 = pneg %p55
        %p194 = pneg %p52
        %s195 = smul.u32 32, %s22
        %p196 = scmp.lt.s32.totalorder %s195, 95
        %s197 = scalar_select %p196, %s195, 95
        %p198 = scmp.lt.s32.totalorder %s21, 0
        %s199 = scalar_select %p198, %s21, 0
        %s200 = sadd.s32 %s199, %s197
        %s201 = smul.addr %s200, 8
        %s202 = scalar_lea.vmem %s1, %s201
        %p203 = pneg %p83
        %p204 = pneg %p80
        %p205 = scmp.lt.s32.totalorder %s21, 0
        %s206 = scalar_select %p205, %s21, 0
        %s207 = scalar_lea.vmem %s2, %s206
        %p208 = pneg %p109
        %p209 = pneg %p106
        %p210 = pneg %p135
        %p211 = pneg %p132
        %s212 = smul.u32 2, %s22
        %p213 = scmp.lt.s32.totalorder %s212, 5
        %s214 = scalar_select %p213, %s212, 5
        %s215 = smul.addr %s214, 2
        %s216 = scalar_lea.vmem %s0, %s215
        %s217 = smul.u32 2, %s22
        %s218 = smul.u32 32, %s22
        %p219 = scmp.lt.s32.totalorder %s218, 95
        %s220 = scalar_select %p219, %s218, 95
        %p221 = scmp.lt.s32.totalorder %s21, 0
        %s222 = scalar_select %p221, %s21, 0
        %s223 = sadd.s32 %s222, %s220
        %s224 = smul.addr %s223, 8
        %s225 = scalar_lea.vmem %s1, %s224
        %s226 = smul.u32 32, %s22
        %p227 = scmp.lt.s32.totalorder %s21, 0
        %s228 = scalar_select %p227, %s21, 0
        %s229 = scalar_lea.vmem %s2, %s228
        %p230 = scmp.eq.s32.totalorder %s22, 0
        // Predicated region
        $region33: #{conv_encoder_forward.5} parent=31 // pred_check
          %p231 = pneg %p230
        $region34: #{conv_encoder_forward.5} parent=31 // pred_check_branch
          %233 = sbr.rel (%p231) target = $region36
        $region35: #{conv_encoder_forward.5} parent=31 // pred_region
          %234 = vst [vmem:[#allocation2] sm:$0x3] 0.0
        $region36: #{conv_encoder_forward.5} parent=31 // pred_fallthru
          _
        %v235 = vld [vmem:[#allocation2] sm:$0x3]
        %v236 = vld [vmem:[%s216] sm:$0xf]
        %v237 = vld [vmem:[%s225] sm:$0xff]
        %v238 = vld [vmem:[%s225 + $0x8] sm:$0xff]
        %v239 = vld [vmem:[%s225 + $0x10] sm:$0xff]
        %v240 = vld [vmem:[%s225 + $0x18] sm:$0xff]
        %v241 = vld [vmem:[%s225 + $0x20] sm:$0xff]
        %v242 = vld [vmem:[%s225 + $0x28] sm:$0xff]
        %v243 = vld [vmem:[%s225 + $0x30] sm:$0xff]
        %v244 = vld [vmem:[%s225 + $0x38] sm:$0xff]
        %v245 = vld [vmem:[%s225 + $0x40] sm:$0xff]
        %v246 = vld [vmem:[%s225 + $0x48] sm:$0xff]
        %v247 = vld [vmem:[%s225 + $0x50] sm:$0xff]
        %v248 = vld [vmem:[%s225 + $0x58] sm:$0xff]
        %v249 = vld [vmem:[%s225 + $0x60] sm:$0xff]
        %v250 = vld [vmem:[%s225 + $0x68] sm:$0xff]
        %v251 = vld [vmem:[%s225 + $0x70] sm:$0xff]
        %v252 = vld [vmem:[%s225 + $0x78] sm:$0xff]
        %v253 = vld [vmem:[%s225 + $0x80] sm:$0xff]
        %v254 = vld [vmem:[%s225 + $0x88] sm:$0xff]
        %v255 = vld [vmem:[%s225 + $0x90] sm:$0xff]
        %v256 = vld [vmem:[%s225 + $0x98] sm:$0xff]
        %v257 = vld [vmem:[%s225 + $0xa0] sm:$0xff]
        %v258 = vld [vmem:[%s225 + $0xa8] sm:$0xff]
        %v259 = vld [vmem:[%s225 + $0xb0] sm:$0xff]
        %v260 = vld [vmem:[%s225 + $0xb8] sm:$0xff]
        %v261 = vld [vmem:[%s225 + $0xc0] sm:$0xff]
        %v262 = vld [vmem:[%s225 + $0xc8] sm:$0xff]
        %v263 = vld [vmem:[%s225 + $0xd0] sm:$0xff]
        %v264 = vld [vmem:[%s225 + $0xd8] sm:$0xff]
        %v265 = vld [vmem:[%s225 + $0xe0] sm:$0xff]
        %v266 = vld [vmem:[%s225 + $0xe8] sm:$0xff]
        %v267 = vld [vmem:[%s225 + $0xf0] sm:$0xff]
        %v268 = vld [vmem:[%s225 + $0xf8] sm:$0xff]
        %v271 = vunpack.c.l.s4 1983009808
        %v272 = vunpack.c.0.s8 %v271
        %v273 = vlaneseq
        %v274 = vshrl.u32 %v273, 7
        %v275 = vsub.s32 %v272, %v274
        %v276 = vrot.slane %v236, %v275
        %v277 = vcombine.high %v276, %v276
        %280 = vmatprep.subr.mxu0 0.0
        %281 = vmatpush1.msra.mxu0 %v237
        %282 = vmatprep.subr.mxu0 0.0
        %283 = vmatpush1.msra.mxu0 %v238
        %284 = vmatprep.subr.mxu0 0.0
        %285 = vmatpush1.msra.mxu0 %v239
        %286 = vmatprep.subr.mxu0 0.0
        %287 = vmatpush1.msra.mxu0 %v240
        %288 = vmatprep.subr.mxu0 0.0
        %289 = vmatpush1.msra.mxu0 %v241
        %290 = vmatprep.subr.mxu0 0.0
        %291 = vmatpush1.msra.mxu0 %v242
        %292 = vmatprep.subr.mxu0 0.0
        %293 = vmatpush1.msra.mxu0 %v243
        %294 = vmatprep.subr.mxu0 0.0
        %295 = vmatpush1.msra.mxu0 %v244
        %296 = vmatprep.subr.mxu0 0.0
        %297 = vmatpush1.msra.mxu0 %v245
        %298 = vmatprep.subr.mxu0 0.0
        %299 = vmatpush1.msra.mxu0 %v246
        %300 = vmatprep.subr.mxu0 0.0
        %301 = vmatpush1.msra.mxu0 %v247
        %302 = vmatprep.subr.mxu0 0.0
        %303 = vmatpush1.msra.mxu0 %v248
        %304 = vmatprep.subr.mxu0 0.0
        %305 = vmatpush1.msra.mxu0 %v249
        %306 = vmatprep.subr.mxu0 0.0
        %307 = vmatpush1.msra.mxu0 %v250
        %308 = vmatprep.subr.mxu0 0.0
        %309 = vmatpush1.msra.mxu0 %v251
        %310 = vmatprep.subr.mxu0 0.0
        %311 = vmatpush1.msra.mxu0 %v252
        %312 = vmatprep.subr.mxu0 0.0
        %313 = vmatpush1.msra.mxu0 %v253
        %314 = vmatprep.subr.mxu0 0.0
        %315 = vmatpush1.msra.mxu0 %v254
        %316 = vmatprep.subr.mxu0 0.0
        %317 = vmatpush1.msra.mxu0 %v255
        %318 = vmatprep.subr.mxu0 0.0
        %319 = vmatpush1.msra.mxu0 %v256
        %320 = vmatprep.subr.mxu0 0.0
        %321 = vmatpush1.msra.mxu0 %v257
        %322 = vmatprep.subr.mxu0 0.0
        %323 = vmatpush1.msra.mxu0 %v258
        %324 = vmatprep.subr.mxu0 0.0
        %325 = vmatpush1.msra.mxu0 %v259
        %326 = vmatprep.subr.mxu0 0.0
        %327 = vmatpush1.msra.mxu0 %v260
        %328 = vmatprep.subr.mxu0 0.0
        %329 = vmatpush1.msra.mxu0 %v261
        %330 = vmatprep.subr.mxu0 0.0
        %331 = vmatpush1.msra.mxu0 %v262
        %332 = vmatprep.subr.mxu0 0.0
        %333 = vmatpush1.msra.mxu0 %v263
        %334 = vmatprep.subr.mxu0 0.0
        %335 = vmatpush1.msra.mxu0 %v264
        %336 = vmatprep.subr.mxu0 0.0
        %337 = vmatpush1.msra.mxu0 %v265
        %338 = vmatprep.subr.mxu0 0.0
        %339 = vmatpush1.msra.mxu0 %v266
        %340 = vmatprep.subr.mxu0 0.0
        %341 = vmatpush1.msra.mxu0 %v267
        %342 = vmatprep.subr.mxu0 0.0
        %343 = vmatpush1.msra.mxu0 %v268
        %344 = vmatprep.mubr.f32.mxu0 %v277
        %345 = vmatmul.mubr.f32.gmra.mrb[0].mxu0 %v276
        %v346 = vpop.f32.mrb[0].mxu0
        %v347 = vadd.f32 0.0, %v346
        %v348 = vpop.f32.mrb[0].mxu0
        %349 = vdwg.mxu0
        %v350 = vadd.f32 %v235, %v347
        %351 = vst [vmem:[#allocation2] sm:$0x3] %v350
        %p352 = scmp.eq.s32.totalorder %s22, 2
        // Predicated region
        $region37: #{conv_encoder_forward.5} parent=31 // pred_check
          %p353 = pneg %p352
        $region38: #{conv_encoder_forward.5} parent=31 // pred_check_branch
          %355 = sbr.rel (%p353) target = $region40
        $region39: #{conv_encoder_forward.5} parent=31 // pred_region
          %v356 = vld [vmem:[#allocation2] sm:$0x3]
          %v357 = vld [vmem:[%s229] sm:$0x1]
          %v359 = vlaneseq
          %v360 = vshrl.u32 %v359, 7
          %v361 = vsub.s32 0, %v360
          %v362 = vrot.slane %v357, %v361
          %v364 = vadd.f32 %v356, %v362
          %365 = vst [vmem:[#allocation3] sm:$0x3] %v364
        $region40: #{conv_encoder_forward.5} parent=31 // pred_fallthru
          _
        // Predicated region
        $region41: #{conv_encoder_forward.5} parent=31 // pred_check
          %p366 = pneg %p132
        $region42: #{conv_encoder_forward.5} parent=31 // pred_check_branch
          %368 = sbr.rel (%p366) target = $region44
        $region43: #{conv_encoder_forward.5} parent=31 // pred_region
          %s370 = ssub.s32 32, 32
          %371 = vsyncadd [#allocation4], %s370
          %s372 = smul.addr %s21, 32
          %s373 = scalar_lea.hbm %s3, %s372
          %s375 = sshll.u32 [#allocation3], 4
          %s376 = int_to_ptr.vmem [resolvable:$true] %s375
          %378 = dma.vmem_to_hbm [thread:$0]  %s376, 32, %s373, [#allocation4]
        $region44: #{conv_encoder_forward.5} parent=31 // pred_fallthru
          _
        // Predicated region
        $region45: #{conv_encoder_forward.5} parent=31 // pred_check
          %p379 = pneg %p132
        $region46: #{conv_encoder_forward.5} parent=31 // pred_check_branch
          %381 = sbr.rel (%p379) target = $region48
        $region47: #{conv_encoder_forward.5} parent=31 // pred_region
          %382 = dma.done [#allocation4], 32
        $region48: #{conv_encoder_forward.5} parent=31 // pred_fallthru
          _
      $region32: #{conv_encoder_forward.5} parent=5 // pred_fallthru
        _
      %p383 = scmp.le.s32.totalorder 2, %s10
      // Predicated region
      $region49: #{conv_encoder_forward.5} parent=5 // pred_check
        %p384 = pneg %p383
      $region50: #{conv_encoder_forward.5} parent=5 // pred_check_branch
        %386 = sbr.rel (%p384) target = $region52
      $region51: #{conv_encoder_forward.5} parent=5 // pred_region
        %s387 = ssub.s32 %s10, 2
      $region52: #{conv_encoder_forward.5} parent=5 // pred_fallthru
        _
    $region6: #{conv_encoder_forward.5} parent=1 // loop_footer
      %s14 = sadd.s32 1, %s10
    $region7: #{conv_encoder_forward.5} parent=1 // loop_footer_branch
      %9 = sbr.rel target = $region3
    $region8: #{conv_encoder_forward.5} parent=1 // loop_exit
      _
    %388 = vsyncpa [#allocation4], 1
    %s389 = scalar_lea.sflag [#allocation4], 1
    %390 = vsyncpa %s389, 1

// kernel: conv_encoder_forward.3
$region0: #{conv_encoder_forward.3}
  #allocation0 [shape = 'u32[]', space=smem, size = 0x4, offset = 0x4, fixed_abs, tag = 'smem constant byte address 0x4 - core index']
  #allocation1 [shape = 'u32[144,128]{1,0:T(1,128)}', space=vmem, size = 0x12000, scoped, tag = 'internal scratch']
  #allocation2 [shape = 'f32[2,8,128]{2,1,0:T(8,128)}', space=vmem, size = 0x2000, scoped, tag = 'scratch operand']
  %s0 = inlined_call_operand.vmem [shape: f32[2,9,256], index: 0, kind: input, shape index: {}]
  %s1 = inlined_call_operand.vmem [shape: f32[256,128], index: 1, kind: input, shape index: {}]
  %s2 = inlined_call_operand.hbm [shape: f32[256,128], index: 2, kind: input, shape index: {}]
  %s3 = inlined_call_operand.vmem [shape: f32[1,1,128], index: 3, kind: input, shape index: {}]
  %s4 = inlined_call_operand.vmem [shape: f32[1,1,128], index: 4, kind: input, shape index: {}, may-alias: {4,5}]
  %s5 = inlined_call_operand.vmem [shape: f32[1,1,128], index: 5, kind: input, shape index: {}, may-alias: {4,5}]
  %s6 = inlined_call_operand.vmem [shape: f32[2,10,128], index: 6, kind: output, shape index: {}]
  %s7 = sld [smem:[#allocation0]]
  $region38: #{conv_encoder_forward.3} parent=0
    _
  %s9 = ssub.s32 1, %s7
  %s10 = scalar_select 0, %s9, %s7
  $region1: #{conv_encoder_forward.3} parent=0
    #allocation3 [shape = 'u8[131072]{0}', space=vmem, size = 0x20000, scoped, tag = 'input window, operand 2, single buffered']
    #allocation4 [shape = 's32[1]{0}', space=sflag, size = 0x4, scoped, tag = 'scoped memory for conv_encoder_forward.3']
    %11 = vsyncpa [#allocation4], 0
    // Predicated region
    $region2: #{conv_encoder_forward.3} parent=1 // pred_check
      _
    $region3: #{conv_encoder_forward.3} parent=1 // pred_check_branch
      %13 = sbr.rel (0) target = $region5
    $region4: #{conv_encoder_forward.3} parent=1 // pred_region
      _
    $region5: #{conv_encoder_forward.3} parent=1 // pred_fallthru
      _
    // Predicated region
    $region6: #{conv_encoder_forward.3} parent=1 // pred_check
      _
    $region7: #{conv_encoder_forward.3} parent=1 // pred_check_branch
      %15 = sbr.rel (0) target = $region9
    $region8: #{conv_encoder_forward.3} parent=1 // pred_region
      _
    $region9: #{conv_encoder_forward.3} parent=1 // pred_fallthru
      _
    // Predicated region
    $region10: #{conv_encoder_forward.3} parent=1 // pred_check
      _
    $region11: #{conv_encoder_forward.3} parent=1 // pred_check_branch
      %17 = sbr.rel (0) target = $region13
    $region12: #{conv_encoder_forward.3} parent=1 // pred_region
      %s19 = ssub.s32 4096, 4096
      %20 = vsyncadd [#allocation4], %s19
      %s21 = sshll.u32 [#allocation3], 4
      %s22 = int_to_ptr.vmem [resolvable:$true] %s21
      %27 = dma.hbm_to_vmem [thread:$0]  %s2, 4096, %s22, [#allocation4], 128, 128, 8
    $region13: #{conv_encoder_forward.3} parent=1 // pred_fallthru
      _
    // Predicated region
    $region14: #{conv_encoder_forward.3} parent=1 // pred_check
      _
    $region15: #{conv_encoder_forward.3} parent=1 // pred_check_branch
      %29 = sbr.rel (0) target = $region17
    $region16: #{conv_encoder_forward.3} parent=1 // pred_region
      _
    $region17: #{conv_encoder_forward.3} parent=1 // pred_fallthru
      _
    // Predicated region
    $region18: #{conv_encoder_forward.3} parent=1 // pred_check
      _
    $region19: #{conv_encoder_forward.3} parent=1 // pred_check_branch
      %31 = sbr.rel (0) target = $region21
    $region20: #{conv_encoder_forward.3} parent=1 // pred_region
      _
    $region21: #{conv_encoder_forward.3} parent=1 // pred_fallthru
      _
    // Predicated region
    $region22: #{conv_encoder_forward.3} parent=1 // pred_check
      _
    $region23: #{conv_encoder_forward.3} parent=1 // pred_check_branch
      %33 = sbr.rel (0) target = $region25
    $region24: #{conv_encoder_forward.3} parent=1 // pred_region
      _
    $region25: #{conv_encoder_forward.3} parent=1 // pred_fallthru
      _
    // Predicated region
    $region26: #{conv_encoder_forward.3} parent=1 // pred_check
      _
    $region27: #{conv_encoder_forward.3} parent=1 // pred_check_branch
      %35 = sbr.rel (0) target = $region29
    $region28: #{conv_encoder_forward.3} parent=1 // pred_region
      %36 = dma.done [#allocation4], 4096
    $region29: #{conv_encoder_forward.3} parent=1 // pred_fallthru
      _
    %v37 = vld [vmem:[%s1] sm:$0xff]
    %v38 = vld [vmem:[%s1 + $0x8] sm:$0xff]
    %v39 = vld [vmem:[%s1 + $0x10] sm:$0xff]
    %v40 = vld [vmem:[%s1 + $0x18] sm:$0xff]
    %v41 = vld [vmem:[%s1 + $0x20] sm:$0xff]
    %v42 = vld [vmem:[%s1 + $0x28] sm:$0xff]
    %v43 = vld [vmem:[%s1 + $0x30] sm:$0xff]
    %v44 = vld [vmem:[%s1 + $0x38] sm:$0xff]
    %v45 = vld [vmem:[%s1 + $0x40] sm:$0xff]
    %v46 = vld [vmem:[%s1 + $0x48] sm:$0xff]
    %v47 = vld [vmem:[%s1 + $0x50] sm:$0xff]
    %v48 = vld [vmem:[%s1 + $0x58] sm:$0xff]
    %v49 = vld [vmem:[%s1 + $0x60] sm:$0xff]
    %v50 = vld [vmem:[%s1 + $0x68] sm:$0xff]
    %v51 = vld [vmem:[%s1 + $0x70] sm:$0xff]
    %v52 = vld [vmem:[%s1 + $0x78] sm:$0xff]
    %v53 = vld [vmem:[%s1 + $0x80] sm:$0xff]
    %v54 = vld [vmem:[%s1 + $0x88] sm:$0xff]
    %v55 = vld [vmem:[%s1 + $0x90] sm:$0xff]
    %v56 = vld [vmem:[%s1 + $0x98] sm:$0xff]
    %v57 = vld [vmem:[%s1 + $0xa0] sm:$0xff]
    %v58 = vld [vmem:[%s1 + $0xa8] sm:$0xff]
    %v59 = vld [vmem:[%s1 + $0xb0] sm:$0xff]
    %v60 = vld [vmem:[%s1 + $0xb8] sm:$0xff]
    %v61 = vld [vmem:[%s1 + $0xc0] sm:$0xff]
    %v62 = vld [vmem:[%s1 + $0xc8] sm:$0xff]
    %v63 = vld [vmem:[%s1 + $0xd0] sm:$0xff]
    %v64 = vld [vmem:[%s1 + $0xd8] sm:$0xff]
    %v65 = vld [vmem:[%s1 + $0xe0] sm:$0xff]
    %v66 = vld [vmem:[%s1 + $0xe8] sm:$0xff]
    %v67 = vld [vmem:[%s1 + $0xf0] sm:$0xff]
    %v68 = vld [vmem:[%s1 + $0xf8] sm:$0xff]
    %v69 = vld [vmem:[#allocation3] sm:$0xff]
    %v70 = vld [vmem:[#allocation3 + $0x8] sm:$0xff]
    %v71 = vld [vmem:[#allocation3 + $0x10] sm:$0xff]
    %v72 = vld [vmem:[#allocation3 + $0x18] sm:$0xff]
    %v73 = vld [vmem:[#allocation3 + $0x20] sm:$0xff]
    %v74 = vld [vmem:[#allocation3 + $0x28] sm:$0xff]
    %v75 = vld [vmem:[#allocation3 + $0x30] sm:$0xff]
    %v76 = vld [vmem:[#allocation3 + $0x38] sm:$0xff]
    %v77 = vld [vmem:[#allocation3 + $0x40] sm:$0xff]
    %v78 = vld [vmem:[#allocation3 + $0x48] sm:$0xff]
    %v79 = vld [vmem:[#allocation3 + $0x50] sm:$0xff]
    %v80 = vld [vmem:[#allocation3 + $0x58] sm:$0xff]
    %v81 = vld [vmem:[#allocation3 + $0x60] sm:$0xff]
    %v82 = vld [vmem:[#allocation3 + $0x68] sm:$0xff]
    %v83 = vld [vmem:[#allocation3 + $0x70] sm:$0xff]
    %v84 = vld [vmem:[#allocation3 + $0x78] sm:$0xff]
    %v85 = vld [vmem:[#allocation3 + $0x80] sm:$0xff]
    %v86 = vld [vmem:[#allocation3 + $0x88] sm:$0xff]
    %v87 = vld [vmem:[#allocation3 + $0x90] sm:$0xff]
    %v88 = vld [vmem:[#allocation3 + $0x98] sm:$0xff]
    %v89 = vld [vmem:[#allocation3 + $0xa0] sm:$0xff]
    %v90 = vld [vmem:[#allocation3 + $0xa8] sm:$0xff]
    %v91 = vld [vmem:[#allocation3 + $0xb0] sm:$0xff]
    %v92 = vld [vmem:[#allocation3 + $0xb8] sm:$0xff]
    %v93 = vld [vmem:[#allocation3 + $0xc0] sm:$0xff]
    %v94 = vld [vmem:[#allocation3 + $0xc8] sm:$0xff]
    %v95 = vld [vmem:[#allocation3 + $0xd0] sm:$0xff]
    %v96 = vld [vmem:[#allocation3 + $0xd8] sm:$0xff]
    %v97 = vld [vmem:[#allocation3 + $0xe0] sm:$0xff]
    %v98 = vld [vmem:[#allocation3 + $0xe8] sm:$0xff]
    %v99 = vld [vmem:[#allocation3 + $0xf0] sm:$0xff]
    %v100 = vld [vmem:[#allocation3 + $0xf8] sm:$0xff]
    %v101 = vld [vmem:[%s0] sm:$0xff]
    %v102 = vld [vmem:[%s0 + $0x8] sm:$0xff]
    %v103 = vld [vmem:[%s0] sm:$0xfe]
    %v104 = vld [vmem:[%s0 + $0x8] sm:$0xfe]
    %v105 = vld [vmem:[%s0 + $0x10] sm:$0x1]
    %v106 = vld [vmem:[%s0 + $0x18] sm:$0x1]
    %vm111 = vcmask 1046528
    %v112 = vrot.slane %v103, 1
    %v113 = vrot.slane %v105, 1
    %v114 = vsel %vm111, %v112, %v113
    %v115 = vrot.slane %v104, 1
    %v116 = vrot.slane %v106, 1
    %v117 = vsel %vm111, %v115, %v116
    %120 = vmatprep.subr.mxu0 0.0
    %121 = vmatpush1.msra.mxu0 %v69
    %122 = vmatprep.subr.mxu0 0.0
    %123 = vmatpush1.msra.mxu0 %v70
    %124 = vmatprep.subr.mxu0 0.0
    %125 = vmatpush1.msra.mxu0 %v71
    %126 = vmatprep.subr.mxu0 0.0
    %127 = vmatpush1.msra.mxu0 %v72
    %128 = vmatprep.subr.mxu0 0.0
    %129 = vmatpush1.msra.mxu0 %v73
    %130 = vmatprep.subr.mxu0 0.0
    %131 = vmatpush1.msra.mxu0 %v74
    %132 = vmatprep.subr.mxu0 0.0
    %133 = vmatpush1.msra.mxu0 %v75
    %134 = vmatprep.subr.mxu0 0.0
    %135 = vmatpush1.msra.mxu0 %v76
    %136 = vmatprep.subr.mxu0 0.0
    %137 = vmatpush1.msra.mxu0 %v77
    %138 = vmatprep.subr.mxu0 0.0
    %139 = vmatpush1.msra.mxu0 %v78
    %140 = vmatprep.subr.mxu0 0.0
    %141 = vmatpush1.msra.mxu0 %v79
    %142 = vmatprep.subr.mxu0 0.0
    %143 = vmatpush1.msra.mxu0 %v80
    %144 = vmatprep.subr.mxu0 0.0
    %145 = vmatpush1.msra.mxu0 %v81
    %146 = vmatprep.subr.mxu0 0.0
    %147 = vmatpush1.msra.mxu0 %v82
    %148 = vmatprep.subr.mxu0 0.0
    %149 = vmatpush1.msra.mxu0 %v83
    %150 = vmatprep.subr.mxu0 0.0
    %151 = vmatpush1.msra.mxu0 %v84
    %152 = vmatprep.subr.mxu0 0.0
    %153 = vmatpush1.msra.mxu0 %v85
    %154 = vmatprep.subr.mxu0 0.0
    %155 = vmatpush1.msra.mxu0 %v86
    %156 = vmatprep.subr.mxu0 0.0
    %157 = vmatpush1.msra.mxu0 %v87
    %158 = vmatprep.subr.mxu0 0.0
    %159 = vmatpush1.msra.mxu0 %v88
    %160 = vmatprep.subr.mxu0 0.0
    %161 = vmatpush1.msra.mxu0 %v89
    %162 = vmatprep.subr.mxu0 0.0
    %163 = vmatpush1.msra.mxu0 %v90
    %164 = vmatprep.subr.mxu0 0.0
    %165 = vmatpush1.msra.mxu0 %v91
    %166 = vmatprep.subr.mxu0 0.0
    %167 = vmatpush1.msra.mxu0 %v92
    %168 = vmatprep.subr.mxu0 0.0
    %169 = vmatpush1.msra.mxu0 %v93
    %170 = vmatprep.subr.mxu0 0.0
    %171 = vmatpush1.msra.mxu0 %v94
    %172 = vmatprep.subr.mxu0 0.0
    %173 = vmatpush1.msra.mxu0 %v95
    %174 = vmatprep.subr.mxu0 0.0
    %175 = vmatpush1.msra.mxu0 %v96
    %176 = vmatprep.subr.mxu0 0.0
    %177 = vmatpush1.msra.mxu0 %v97
    %178 = vmatprep.subr.mxu0 0.0
    %179 = vmatpush1.msra.mxu0 %v98
    %180 = vmatprep.subr.mxu0 0.0
    %181 = vmatpush1.msra.mxu0 %v99
    %182 = vmatprep.subr.mxu0 0.0
    %183 = vmatpush1.msra.mxu0 %v100
    %184 = vmatprep.mubr.f32.mxu0 %v117
    %185 = vmatmul.mubr.f32.gmra.mrb[0].mxu0 %v114
    %v186 = vpop.f32.mrb[0].mxu0
    %v187 = vadd.f32 0.0, %v186
    %v188 = vpop.f32.mrb[0].mxu0
    %189 = vdwg.mxu0
    %190 = vmatprep.subr.mxu0 0.0
    %191 = vmatpush1.msra.mxu0 %v37
    %192 = vmatprep.subr.mxu0 0.0
    %193 = vmatpush1.msra.mxu0 %v38
    %194 = vmatprep.subr.mxu0 0.0
    %195 = vmatpush1.msra.mxu0 %v39
    %196 = vmatprep.subr.mxu0 0.0
    %197 = vmatpush1.msra.mxu0 %v40
    %198 = vmatprep.subr.mxu0 0.0
    %199 = vmatpush1.msra.mxu0 %v41
    %200 = vmatprep.subr.mxu0 0.0
    %201 = vmatpush1.msra.mxu0 %v42
    %202 = vmatprep.subr.mxu0 0.0
    %203 = vmatpush1.msra.mxu0 %v43
    %204 = vmatprep.subr.mxu0 0.0
    %205 = vmatpush1.msra.mxu0 %v44
    %206 = vmatprep.subr.mxu0 0.0
    %207 = vmatpush1.msra.mxu0 %v45
    %208 = vmatprep.subr.mxu0 0.0
    %209 = vmatpush1.msra.mxu0 %v46
    %210 = vmatprep.subr.mxu0 0.0
    %211 = vmatpush1.msra.mxu0 %v47
    %212 = vmatprep.subr.mxu0 0.0
    %213 = vmatpush1.msra.mxu0 %v48
    %214 = vmatprep.subr.mxu0 0.0
    %215 = vmatpush1.msra.mxu0 %v49
    %216 = vmatprep.subr.mxu0 0.0
    %217 = vmatpush1.msra.mxu0 %v50
    %218 = vmatprep.subr.mxu0 0.0
    %219 = vmatpush1.msra.mxu0 %v51
    %220 = vmatprep.subr.mxu0 0.0
    %221 = vmatpush1.msra.mxu0 %v52
    %222 = vmatprep.subr.mxu0 0.0
    %223 = vmatpush1.msra.mxu0 %v53
    %224 = vmatprep.subr.mxu0 0.0
    %225 = vmatpush1.msra.mxu0 %v54
    %226 = vmatprep.subr.mxu0 0.0
    %227 = vmatpush1.msra.mxu0 %v55
    %228 = vmatprep.subr.mxu0 0.0
    %229 = vmatpush1.msra.mxu0 %v56
    %230 = vmatprep.subr.mxu0 0.0
    %231 = vmatpush1.msra.mxu0 %v57
    %232 = vmatprep.subr.mxu0 0.0
    %233 = vmatpush1.msra.mxu0 %v58
    %234 = vmatprep.subr.mxu0 0.0
    %235 = vmatpush1.msra.mxu0 %v59
    %236 = vmatprep.subr.mxu0 0.0
    %237 = vmatpush1.msra.mxu0 %v60
    %238 = vmatprep.subr.mxu0 0.0
    %239 = vmatpush1.msra.mxu0 %v61
    %240 = vmatprep.subr.mxu0 0.0
    %241 = vmatpush1.msra.mxu0 %v62
    %242 = vmatprep.subr.mxu0 0.0
    %243 = vmatpush1.msra.mxu0 %v63
    %244 = vmatprep.subr.mxu0 0.0
    %245 = vmatpush1.msra.mxu0 %v64
    %246 = vmatprep.subr.mxu0 0.0
    %247 = vmatpush1.msra.mxu0 %v65
    %248 = vmatprep.subr.mxu0 0.0
    %249 = vmatpush1.msra.mxu0 %v66
    %250 = vmatprep.subr.mxu0 0.0
    %251 = vmatpush1.msra.mxu0 %v67
    %252 = vmatprep.subr.mxu0 0.0
    %253 = vmatpush1.msra.mxu0 %v68
    %254 = vmatprep.mubr.f32.mxu0 %v102
    %255 = vmatmul.mubr.f32.gmra.mrb[0].mxu0 %v101
    %v256 = vpop.f32.mrb[0].mxu0
    %v257 = vadd.f32 %v187, %v256
    %v258 = vpop.f32.mrb[0].mxu0
    %259 = vdwg.mxu0
    %260 = vst [vmem:[#allocation2] sm:$0xff] %v257
    %s261 = scalar_lea.vmem %s0, 32
    %v262 = vld [vmem:[%s261] sm:$0xff]
    %v263 = vld [vmem:[%s261 + $0x8] sm:$0xff]
    %v264 = vld [vmem:[%s261] sm:$0xfe]
    %v265 = vld [vmem:[%s261 + $0x8] sm:$0xfe]
    %v266 = vld [vmem:[%s261 + $0x10] sm:$0x1]
    %v267 = vld [vmem:[%s261 + $0x18] sm:$0x1]
    %v272 = vrot.slane %v264, 1
    %v273 = vrot.slane %v266, 1
    %v274 = vsel %vm111, %v272, %v273
    %v275 = vrot.slane %v265, 1
    %v276 = vrot.slane %v267, 1
    %v277 = vsel %vm111, %v275, %v276
    %280 = vmatprep.subr.mxu0 0.0
    %281 = vmatpush1.msra.mxu0 %v69
    %282 = vmatprep.subr.mxu0 0.0
    %283 = vmatpush1.msra.mxu0 %v70
    %284 = vmatprep.subr.mxu0 0.0
    %285 = vmatpush1.msra.mxu0 %v71
    %286 = vmatprep.subr.mxu0 0.0
    %287 = vmatpush1.msra.mxu0 %v72
    %288 = vmatprep.subr.mxu0 0.0
    %289 = vmatpush1.msra.mxu0 %v73
    %290 = vmatprep.subr.mxu0 0.0
    %291 = vmatpush1.msra.mxu0 %v74
    %292 = vmatprep.subr.mxu0 0.0
    %293 = vmatpush1.msra.mxu0 %v75
    %294 = vmatprep.subr.mxu0 0.0
    %295 = vmatpush1.msra.mxu0 %v76
    %296 = vmatprep.subr.mxu0 0.0
    %297 = vmatpush1.msra.mxu0 %v77
    %298 = vmatprep.subr.mxu0 0.0
    %299 = vmatpush1.msra.mxu0 %v78
    %300 = vmatprep.subr.mxu0 0.0
    %301 = vmatpush1.msra.mxu0 %v79
    %302 = vmatprep.subr.mxu0 0.0
    %303 = vmatpush1.msra.mxu0 %v80
    %304 = vmatprep.subr.mxu0 0.0
    %305 = vmatpush1.msra.mxu0 %v81
    %306 = vmatprep.subr.mxu0 0.0
    %307 = vmatpush1.msra.mxu0 %v82
    %308 = vmatprep.subr.mxu0 0.0
    %309 = vmatpush1.msra.mxu0 %v83
    %310 = vmatprep.subr.mxu0 0.0
    %311 = vmatpush1.msra.mxu0 %v84
    %312 = vmatprep.subr.mxu0 0.0
    %313 = vmatpush1.msra.mxu0 %v85
    %314 = vmatprep.subr.mxu0 0.0
    %315 = vmatpush1.msra.mxu0 %v86
    %316 = vmatprep.subr.mxu0 0.0
    %317 = vmatpush1.msra.mxu0 %v87
    %318 = vmatprep.subr.mxu0 0.0
    %319 = vmatpush1.msra.mxu0 %v88
    %320 = vmatprep.subr.mxu0 0.0
    %321 = vmatpush1.msra.mxu0 %v89
    %322 = vmatprep.subr.mxu0 0.0
    %323 = vmatpush1.msra.mxu0 %v90
    %324 = vmatprep.subr.mxu0 0.0
    %325 = vmatpush1.msra.mxu0 %v91
    %326 = vmatprep.subr.mxu0 0.0
    %327 = vmatpush1.msra.mxu0 %v92
    %328 = vmatprep.subr.mxu0 0.0
    %329 = vmatpush1.msra.mxu0 %v93
    %330 = vmatprep.subr.mxu0 0.0
    %331 = vmatpush1.msra.mxu0 %v94
    %332 = vmatprep.subr.mxu0 0.0
    %333 = vmatpush1.msra.mxu0 %v95
    %334 = vmatprep.subr.mxu0 0.0
    %335 = vmatpush1.msra.mxu0 %v96
    %336 = vmatprep.subr.mxu0 0.0
    %337 = vmatpush1.msra.mxu0 %v97
    %338 = vmatprep.subr.mxu0 0.0
    %339 = vmatpush1.msra.mxu0 %v98
    %340 = vmatprep.subr.mxu0 0.0
    %341 = vmatpush1.msra.mxu0 %v99
    %342 = vmatprep.subr.mxu0 0.0
    %343 = vmatpush1.msra.mxu0 %v100
    %344 = vmatprep.mubr.f32.mxu0 %v277
    %345 = vmatmul.mubr.f32.gmra.mrb[0].mxu0 %v274
    %v346 = vpop.f32.mrb[0].mxu0
    %v347 = vadd.f32 0.0, %v346
    %v348 = vpop.f32.mrb[0].mxu0
    %349 = vdwg.mxu0
    %350 = vmatprep.subr.mxu0 0.0
    %351 = vmatpush1.msra.mxu0 %v37
    %352 = vmatprep.subr.mxu0 0.0
    %353 = vmatpush1.msra.mxu0 %v38
    %354 = vmatprep.subr.mxu0 0.0
    %355 = vmatpush1.msra.mxu0 %v39
    %356 = vmatprep.subr.mxu0 0.0
    %357 = vmatpush1.msra.mxu0 %v40
    %358 = vmatprep.subr.mxu0 0.0
    %359 = vmatpush1.msra.mxu0 %v41
    %360 = vmatprep.subr.mxu0 0.0
    %361 = vmatpush1.msra.mxu0 %v42
    %362 = vmatprep.subr.mxu0 0.0
    %363 = vmatpush1.msra.mxu0 %v43
    %364 = vmatprep.subr.mxu0 0.0
    %365 = vmatpush1.msra.mxu0 %v44
    %366 = vmatprep.subr.mxu0 0.0
    %367 = vmatpush1.msra.mxu0 %v45
    %368 = vmatprep.subr.mxu0 0.0
    %369 = vmatpush1.msra.mxu0 %v46
    %370 = vmatprep.subr.mxu0 0.0
    %371 = vmatpush1.msra.mxu0 %v47
    %372 = vmatprep.subr.mxu0 0.0
    %373 = vmatpush1.msra.mxu0 %v48
    %374 = vmatprep.subr.mxu0 0.0
    %375 = vmatpush1.msra.mxu0 %v49
    %376 = vmatprep.subr.mxu0 0.0
    %377 = vmatpush1.msra.mxu0 %v50
    %378 = vmatprep.subr.mxu0 0.0
    %379 = vmatpush1.msra.mxu0 %v51
    %380 = vmatprep.subr.mxu0 0.0
    %381 = vmatpush1.msra.mxu0 %v52
    %382 = vmatprep.subr.mxu0 0.0
    %383 = vmatpush1.msra.mxu0 %v53
    %384 = vmatprep.subr.mxu0 0.0
    %385 = vmatpush1.msra.mxu0 %v54
    %386 = vmatprep.subr.mxu0 0.0
    %387 = vmatpush1.msra.mxu0 %v55
    %388 = vmatprep.subr.mxu0 0.0
    %389 = vmatpush1.msra.mxu0 %v56
    %390 = vmatprep.subr.mxu0 0.0
    %391 = vmatpush1.msra.mxu0 %v57
    %392 = vmatprep.subr.mxu0 0.0
    %393 = vmatpush1.msra.mxu0 %v58
    %394 = vmatprep.subr.mxu0 0.0
    %395 = vmatpush1.msra.mxu0 %v59
    %396 = vmatprep.subr.mxu0 0.0
    %397 = vmatpush1.msra.mxu0 %v60
    %398 = vmatprep.subr.mxu0 0.0
    %399 = vmatpush1.msra.mxu0 %v61
    %400 = vmatprep.subr.mxu0 0.0
    %401 = vmatpush1.msra.mxu0 %v62
    %402 = vmatprep.subr.mxu0 0.0
    %403 = vmatpush1.msra.mxu0 %v63
    %404 = vmatprep.subr.mxu0 0.0
    %405 = vmatpush1.msra.mxu0 %v64
    %406 = vmatprep.subr.mxu0 0.0
    %407 = vmatpush1.msra.mxu0 %v65
    %408 = vmatprep.subr.mxu0 0.0
    %409 = vmatpush1.msra.mxu0 %v66
    %410 = vmatprep.subr.mxu0 0.0
    %411 = vmatpush1.msra.mxu0 %v67
    %412 = vmatprep.subr.mxu0 0.0
    %413 = vmatpush1.msra.mxu0 %v68
    %414 = vmatprep.mubr.f32.mxu0 %v263
    %415 = vmatmul.mubr.f32.gmra.mrb[0].mxu0 %v262
    %v416 = vpop.f32.mrb[0].mxu0
    %v417 = vadd.f32 %v347, %v416
    %v418 = vpop.f32.mrb[0].mxu0
    %419 = vdwg.mxu0
    %s420 = scalar_lea.vmem [#allocation2], 8
    %421 = vst [vmem:[%s420] sm:$0xff] %v417
    %v422 = vld [vmem:[#allocation2] sm:$0xff]
    %v423 = vld [vmem:[#allocation2 + $0x8] sm:$0xff]
    %v424 = vld [vmem:[%s3] sm:$0x1]
    %v426 = vlaneseq
    %v427 = vshrl.u32 %v426, 7
    %v428 = vsub.s32 0, %v427
    %v429 = vrot.slane %v424, %v428
    %v431 = vadd.f32 %v422, %v429
    %v432 = vadd.f32 %v423, %v429
    %vm433 = vcmp.ge.f32.partialorder %v431, 0.0
    %vm434 = vcmp.ge.f32.partialorder %v432, 0.0
    %v435 = vmul.f32 %v431, 0.2
    %v436 = vmul.f32 %v432, 0.2
    %v437 = vsel %vm433, %v431, %v435
    %v438 = vsel %vm434, %v432, %v436
    %439 = vst [vmem:[%s6] sm:$0xff] 0.0
    %440 = vst [vmem:[%s6 + $0x8] sm:$0x3] 0.0
    %441 = vst [vmem:[%s6 + $0x10] sm:$0xff] 0.0
    %442 = vst [vmem:[%s6 + $0x18] sm:$0x3] 0.0
    %443 = vst [vmem:[%s6 + $0x1] sm:$0xff] %v437
    %444 = vst [vmem:[%s6 + $0x11] sm:$0xff] %v438
    // Predicated region
    $region30: #{conv_encoder_forward.3} parent=1 // pred_check
      _
    $region31: #{conv_encoder_forward.3} parent=1 // pred_check_branch
      %446 = sbr.rel (0) target = $region33
    $region32: #{conv_encoder_forward.3} parent=1 // pred_region
      _
    $region33: #{conv_encoder_forward.3} parent=1 // pred_fallthru
      _
    // Predicated region
    $region34: #{conv_encoder_forward.3} parent=1 // pred_check
      _
    $region35: #{conv_encoder_forward.3} parent=1 // pred_check_branch
      %448 = sbr.rel (0) target = $region37
    $region36: #{conv_encoder_forward.3} parent=1 // pred_region
      _
    $region37: #{conv_encoder_forward.3} parent=1 // pred_fallthru
      _
    %449 = vsyncpa [#allocation4], 1

// kernel: conv_encoder_forward.4
$region0: #{conv_encoder_forward.4}
  #allocation0 [shape = 'u32[]', space=smem, size = 0x4, offset = 0x4, fixed_abs, tag = 'smem constant byte address 0x4 - core index']
  #allocation1 [shape = 'u32[144,128]{1,0:T(1,128)}', space=vmem, size = 0x12000, scoped, tag = 'internal scratch']
  #allocation2 [shape = 'f32[2,4,128]{2,1,0:T(4,128)}', space=vmem, size = 0x1000, scoped, tag = 'scratch operand']
  %s0 = inlined_call_operand.vmem [shape: f32[2,5,256], index: 0, kind: input, shape index: {}]
  %s1 = inlined_call_operand.vmem [shape: f32[256,128], index: 1, kind: input, shape index: {}]
  %s2 = inlined_call_operand.vmem [shape: f32[256,128], index: 2, kind: input, shape index: {}]
  %s3 = inlined_call_operand.hbm [shape: f32[1,1,128], index: 3, kind: input, shape index: {}]
  %s4 = inlined_call_operand.hbm [shape: f32[1,1,128], index: 4, kind: input, shape index: {}]
  %s5 = inlined_call_operand.vmem [shape: f32[1,1,128], index: 5, kind: input, shape index: {}]
  %s6 = inlined_call_operand.vmem [shape: f32[2,6,128], index: 6, kind: output, shape index: {}]
  %s7 = sld [smem:[#allocation0]]
  $region42: #{conv_encoder_forward.4} parent=0
    _
  %s9 = ssub.s32 1, %s7
  %s10 = scalar_select 0, %s9, %s7
  $region1: #{conv_encoder_forward.4} parent=0
    #allocation3 [shape = 'u8[512]{0}', space=vmem, size = 0x400, scoped, tag = 'input window, operand 3, single buffered']
    #allocation4 [shape = 's32[1]{0}', space=sflag, size = 0x4, scoped, tag = 'scoped memory for conv_encoder_forward.4']
    #allocation5 [shape = 'u8[512]{0}', space=vmem, size = 0x400, scoped, tag = 'input window, operand 4, single buffered']
    #allocation6 [shape = 's32[1]{0}', space=sflag, size = 0x4, scoped, tag = 'scoped memory for conv_encoder_forward.4']
    %11 = vsyncpa [#allocation4], 0
    %12 = vsyncpa [#allocation6], 0
    // Predicated region
    $region2: #{conv_encoder_forward.4} parent=1 // pred_check
      _
    $region3: #{conv_encoder_forward.4} parent=1 // pred_check_branch
      %14 = sbr.rel (0) target = $region5
    $region4: #{conv_encoder_forward.4} parent=1 // pred_region
      _
    $region5: #{conv_encoder_forward.4} parent=1 // pred_fallthru
      _
    // Predicated region
    $region6: #{conv_encoder_forward.4} parent=1 // pred_check
      _
    $region7: #{conv_encoder_forward.4} parent=1 // pred_check_branch
      %16 = sbr.rel (0) target = $region9
    $region8: #{conv_encoder_forward.4} parent=1 // pred_region
      _
    $region9: #{conv_encoder_forward.4} parent=1 // pred_fallthru
      _
    // Predicated region
    $region10: #{conv_encoder_forward.4} parent=1 // pred_check
      _
    $region11: #{conv_encoder_forward.4} parent=1 // pred_check_branch
      %18 = sbr.rel (0) target = $region13
    $region12: #{conv_encoder_forward.4} parent=1 // pred_region
      _
    $region13: #{conv_encoder_forward.4} parent=1 // pred_fallthru
      _
    // Predicated region
    $region14: #{conv_encoder_forward.4} parent=1 // pred_check
      _
    $region15: #{conv_encoder_forward.4} parent=1 // pred_check_branch
      %20 = sbr.rel (0) target = $region17
    $region16: #{conv_encoder_forward.4} parent=1 // pred_region
      %s22 = ssub.s32 16, 16
      %23 = vsyncadd [#allocation4], %s22
      %s25 = sshll.u32 [#allocation3], 4
      %s26 = int_to_ptr.vmem [resolvable:$true] %s25
      %28 = dma.hbm_to_vmem [thread:$0]  %s3, 16, %s26, [#allocation4]
    $region17: #{conv_encoder_forward.4} parent=1 // pred_fallthru
      _
    // Predicated region
    $region18: #{conv_encoder_forward.4} parent=1 // pred_check
      _
    $region19: #{conv_encoder_forward.4} parent=1 // pred_check_branch
      %30 = sbr.rel (0) target = $region21
    $region20: #{conv_encoder_forward.4} parent=1 // pred_region
      %s32 = ssub.s32 16, 16
      %33 = vsyncadd [#allocation6], %s32
      %s35 = sshll.u32 [#allocation5], 4
      %s36 = int_to_ptr.vmem [resolvable:$true] %s35
      %38 = dma.hbm_to_vmem [thread:$0]  %s4, 16, %s36, [#allocation6]
    $region21: #{conv_encoder_forward.4} parent=1 // pred_fallthru
      _
    // Predicated region
    $region22: #{conv_encoder_forward.4} parent=1 // pred_check
      _
    $region23: #{conv_encoder_forward.4} parent=1 // pred_check_branch
      %40 = sbr.rel (0) target = $region25
    $region24: #{conv_encoder_forward.4} parent=1 // pred_region
      _
    $region25: #{conv_encoder_forward.4} parent=1 // pred_fallthru
      _
    // Predicated region
    $region26: #{conv_encoder_forward.4} parent=1 // pred_check
      _
    $region27: #{conv_encoder_forward.4} parent=1 // pred_check_branch
      %42 = sbr.rel (0) target = $region29
    $region28: #{conv_encoder_forward.4} parent=1 // pred_region
      %43 = dma.done [#allocation4], 16
    $region29: #{conv_encoder_forward.4} parent=1 // pred_fallthru
      _
    // Predicated region
    $region30: #{conv_encoder_forward.4} parent=1 // pred_check
      _
    $region31: #{conv_encoder_forward.4} parent=1 // pred_check_branch
      %45 = sbr.rel (0) target = $region33
    $region32: #{conv_encoder_forward.4} parent=1 // pred_region
      %46 = dma.done [#allocation6], 16
    $region33: #{conv_encoder_forward.4} parent=1 // pred_fallthru
      _
    %v47 = vld [vmem:[%s1] sm:$0xff]
    %v48 = vld [vmem:[%s1 + $0x8] sm:$0xff]
    %v49 = vld [vmem:[%s1 + $0x10] sm:$0xff]
    %v50 = vld [vmem:[%s1 + $0x18] sm:$0xff]
    %v51 = vld [vmem:[%s1 + $0x20] sm:$0xff]
    %v52 = vld [vmem:[%s1 + $0x28] sm:$0xff]
    %v53 = vld [vmem:[%s1 + $0x30] sm:$0xff]
    %v54 = vld [vmem:[%s1 + $0x38] sm:$0xff]
    %v55 = vld [vmem:[%s1 + $0x40] sm:$0xff]
    %v56 = vld [vmem:[%s1 + $0x48] sm:$0xff]
    %v57 = vld [vmem:[%s1 + $0x50] sm:$0xff]
    %v58 = vld [vmem:[%s1 + $0x58] sm:$0xff]
    %v59 = vld [vmem:[%s1 + $0x60] sm:$0xff]
    %v60 = vld [vmem:[%s1 + $0x68] sm:$0xff]
    %v61 = vld [vmem:[%s1 + $0x70] sm:$0xff]
    %v62 = vld [vmem:[%s1 + $0x78] sm:$0xff]
    %v63 = vld [vmem:[%s1 + $0x80] sm:$0xff]
    %v64 = vld [vmem:[%s1 + $0x88] sm:$0xff]
    %v65 = vld [vmem:[%s1 + $0x90] sm:$0xff]
    %v66 = vld [vmem:[%s1 + $0x98] sm:$0xff]
    %v67 = vld [vmem:[%s1 + $0xa0] sm:$0xff]
    %v68 = vld [vmem:[%s1 + $0xa8] sm:$0xff]
    %v69 = vld [vmem:[%s1 + $0xb0] sm:$0xff]
    %v70 = vld [vmem:[%s1 + $0xb8] sm:$0xff]
    %v71 = vld [vmem:[%s1 + $0xc0] sm:$0xff]
    %v72 = vld [vmem:[%s1 + $0xc8] sm:$0xff]
    %v73 = vld [vmem:[%s1 + $0xd0] sm:$0xff]
    %v74 = vld [vmem:[%s1 + $0xd8] sm:$0xff]
    %v75 = vld [vmem:[%s1 + $0xe0] sm:$0xff]
    %v76 = vld [vmem:[%s1 + $0xe8] sm:$0xff]
    %v77 = vld [vmem:[%s1 + $0xf0] sm:$0xff]
    %v78 = vld [vmem:[%s1 + $0xf8] sm:$0xff]
    %v79 = vld [vmem:[%s2] sm:$0xff]
    %v80 = vld [vmem:[%s2 + $0x8] sm:$0xff]
    %v81 = vld [vmem:[%s2 + $0x10] sm:$0xff]
    %v82 = vld [vmem:[%s2 + $0x18] sm:$0xff]
    %v83 = vld [vmem:[%s2 + $0x20] sm:$0xff]
    %v84 = vld [vmem:[%s2 + $0x28] sm:$0xff]
    %v85 = vld [vmem:[%s2 + $0x30] sm:$0xff]
    %v86 = vld [vmem:[%s2 + $0x38] sm:$0xff]
    %v87 = vld [vmem:[%s2 + $0x40] sm:$0xff]
    %v88 = vld [vmem:[%s2 + $0x48] sm:$0xff]
    %v89 = vld [vmem:[%s2 + $0x50] sm:$0xff]
    %v90 = vld [vmem:[%s2 + $0x58] sm:$0xff]
    %v91 = vld [vmem:[%s2 + $0x60] sm:$0xff]
    %v92 = vld [vmem:[%s2 + $0x68] sm:$0xff]
    %v93 = vld [vmem:[%s2 + $0x70] sm:$0xff]
    %v94 = vld [vmem:[%s2 + $0x78] sm:$0xff]
    %v95 = vld [vmem:[%s2 + $0x80] sm:$0xff]
    %v96 = vld [vmem:[%s2 + $0x88] sm:$0xff]
    %v97 = vld [vmem:[%s2 + $0x90] sm:$0xff]
    %v98 = vld [vmem:[%s2 + $0x98] sm:$0xff]
    %v99 = vld [vmem:[%s2 + $0xa0] sm:$0xff]
    %v100 = vld [vmem:[%s2 + $0xa8] sm:$0xff]
    %v101 = vld [vmem:[%s2 + $0xb0] sm:$0xff]
    %v102 = vld [vmem:[%s2 + $0xb8] sm:$0xff]
    %v103 = vld [vmem:[%s2 + $0xc0] sm:$0xff]
    %v104 = vld [vmem:[%s2 + $0xc8] sm:$0xff]
    %v105 = vld [vmem:[%s2 + $0xd0] sm:$0xff]
    %v106 = vld [vmem:[%s2 + $0xd8] sm:$0xff]
    %v107 = vld [vmem:[%s2 + $0xe0] sm:$0xff]
    %v108 = vld [vmem:[%s2 + $0xe8] sm:$0xff]
    %v109 = vld [vmem:[%s2 + $0xf0] sm:$0xff]
    %v110 = vld [vmem:[%s2 + $0xf8] sm:$0xff]
    %v111 = vld [vmem:[%s0] sm:$0xf]
    %v112 = vld [vmem:[%s0 + $0x8] sm:$0xf]
    %v113 = vld [vmem:[%s0] sm:$0x1e]
    %v114 = vld [vmem:[%s0 + $0x8] sm:$0x1e]
    %v117 = vrot.slane %v113, 1
    %v118 = vrot.slane %v114, 1
    %121 = vmatprep.subr.mxu0 0.0
    %122 = vmatpush1.msra.mxu0 %v79
    %123 = vmatprep.subr.mxu0 0.0
    %124 = vmatpush1.msra.mxu0 %v80
    %125 = vmatprep.subr.mxu0 0.0
    %126 = vmatpush1.msra.mxu0 %v81
    %127 = vmatprep.subr.mxu0 0.0
    %128 = vmatpush1.msra.mxu0 %v82
    %129 = vmatprep.subr.mxu0 0.0
    %130 = vmatpush1.msra.mxu0 %v83
    %131 = vmatprep.subr.mxu0 0.0
    %132 = vmatpush1.msra.mxu0 %v84
    %133 = vmatprep.subr.mxu0 0.0
    %134 = vmatpush1.msra.mxu0 %v85
    %135 = vmatprep.subr.mxu0 0.0
    %136 = vmatpush1.msra.mxu0 %v86
    %137 = vmatprep.subr.mxu0 0.0
    %138 = vmatpush1.msra.mxu0 %v87
    %139 = vmatprep.subr.mxu0 0.0
    %140 = vmatpush1.msra.mxu0 %v88
    %141 = vmatprep.subr.mxu0 0.0
    %142 = vmatpush1.msra.mxu0 %v89
    %143 = vmatprep.subr.mxu0 0.0
    %144 = vmatpush1.msra.mxu0 %v90
    %145 = vmatprep.subr.mxu0 0.0
    %146 = vmatpush1.msra.mxu0 %v91
    %147 = vmatprep.subr.mxu0 0.0
    %148 = vmatpush1.msra.mxu0 %v92
    %149 = vmatprep.subr.mxu0 0.0
    %150 = vmatpush1.msra.mxu0 %v93
    %151 = vmatprep.subr.mxu0 0.0
    %152 = vmatpush1.msra.mxu0 %v94
    %153 = vmatprep.subr.mxu0 0.0
    %154 = vmatpush1.msra.mxu0 %v95
    %155 = vmatprep.subr.mxu0 0.0
    %156 = vmatpush1.msra.mxu0 %v96
    %157 = vmatprep.subr.mxu0 0.0
    %158 = vmatpush1.msra.mxu0 %v97
    %159 = vmatprep.subr.mxu0 0.0
    %160 = vmatpush1.msra.mxu0 %v98
    %161 = vmatprep.subr.mxu0 0.0
    %162 = vmatpush1.msra.mxu0 %v99
    %163 = vmatprep.subr.mxu0 0.0
    %164 = vmatpush1.msra.mxu0 %v100
    %165 = vmatprep.subr.mxu0 0.0
    %166 = vmatpush1.msra.mxu0 %v101
    %167 = vmatprep.subr.mxu0 0.0
    %168 = vmatpush1.msra.mxu0 %v102
    %169 = vmatprep.subr.mxu0 0.0
    %170 = vmatpush1.msra.mxu0 %v103
    %171 = vmatprep.subr.mxu0 0.0
    %172 = vmatpush1.msra.mxu0 %v104
    %173 = vmatprep.subr.mxu0 0.0
    %174 = vmatpush1.msra.mxu0 %v105
    %175 = vmatprep.subr.mxu0 0.0
    %176 = vmatpush1.msra.mxu0 %v106
    %177 = vmatprep.subr.mxu0 0.0
    %178 = vmatpush1.msra.mxu0 %v107
    %179 = vmatprep.subr.mxu0 0.0
    %180 = vmatpush1.msra.mxu0 %v108
    %181 = vmatprep.subr.mxu0 0.0
    %182 = vmatpush1.msra.mxu0 %v109
    %183 = vmatprep.subr.mxu0 0.0
    %184 = vmatpush1.msra.mxu0 %v110
    %185 = vmatprep.mubr.f32.mxu0 %v118
    %186 = vmatmul.mubr.f32.gmra.mrb[0].mxu0 %v117
    %v187 = vpop.f32.mrb[0].mxu0
    %v188 = vadd.f32 0.0, %v187
    %v189 = vpop.f32.mrb[0].mxu0
    %190 = vdwg.mxu0
    %191 = vmatprep.subr.mxu0 0.0
    %192 = vmatpush1.msra.mxu0 %v47
    %193 = vmatprep.subr.mxu0 0.0
    %194 = vmatpush1.msra.mxu0 %v48
    %195 = vmatprep.subr.mxu0 0.0
    %196 = vmatpush1.msra.mxu0 %v49
    %197 = vmatprep.subr.mxu0 0.0
    %198 = vmatpush1.msra.mxu0 %v50
    %199 = vmatprep.subr.mxu0 0.0
    %200 = vmatpush1.msra.mxu0 %v51
    %201 = vmatprep.subr.mxu0 0.0
    %202 = vmatpush1.msra.mxu0 %v52
    %203 = vmatprep.subr.mxu0 0.0
    %204 = vmatpush1.msra.mxu0 %v53
    %205 = vmatprep.subr.mxu0 0.0
    %206 = vmatpush1.msra.mxu0 %v54
    %207 = vmatprep.subr.mxu0 0.0
    %208 = vmatpush1.msra.mxu0 %v55
    %209 = vmatprep.subr.mxu0 0.0
    %210 = vmatpush1.msra.mxu0 %v56
    %211 = vmatprep.subr.mxu0 0.0
    %212 = vmatpush1.msra.mxu0 %v57
    %213 = vmatprep.subr.mxu0 0.0
    %214 = vmatpush1.msra.mxu0 %v58
    %215 = vmatprep.subr.mxu0 0.0
    %216 = vmatpush1.msra.mxu0 %v59
    %217 = vmatprep.subr.mxu0 0.0
    %218 = vmatpush1.msra.mxu0 %v60
    %219 = vmatprep.subr.mxu0 0.0
    %220 = vmatpush1.msra.mxu0 %v61
    %221 = vmatprep.subr.mxu0 0.0
    %222 = vmatpush1.msra.mxu0 %v62
    %223 = vmatprep.subr.mxu0 0.0
    %224 = vmatpush1.msra.mxu0 %v63
    %225 = vmatprep.subr.mxu0 0.0
    %226 = vmatpush1.msra.mxu0 %v64
    %227 = vmatprep.subr.mxu0 0.0
    %228 = vmatpush1.msra.mxu0 %v65
    %229 = vmatprep.subr.mxu0 0.0
    %230 = vmatpush1.msra.mxu0 %v66
    %231 = vmatprep.subr.mxu0 0.0
    %232 = vmatpush1.msra.mxu0 %v67
    %233 = vmatprep.subr.mxu0 0.0
    %234 = vmatpush1.msra.mxu0 %v68
    %235 = vmatprep.subr.mxu0 0.0
    %236 = vmatpush1.msra.mxu0 %v69
    %237 = vmatprep.subr.mxu0 0.0
    %238 = vmatpush1.msra.mxu0 %v70
    %239 = vmatprep.subr.mxu0 0.0
    %240 = vmatpush1.msra.mxu0 %v71
    %241 = vmatprep.subr.mxu0 0.0
    %242 = vmatpush1.msra.mxu0 %v72
    %243 = vmatprep.subr.mxu0 0.0
    %244 = vmatpush1.msra.mxu0 %v73
    %245 = vmatprep.subr.mxu0 0.0
    %246 = vmatpush1.msra.mxu0 %v74
    %247 = vmatprep.subr.mxu0 0.0
    %248 = vmatpush1.msra.mxu0 %v75
    %249 = vmatprep.subr.mxu0 0.0
    %250 = vmatpush1.msra.mxu0 %v76
    %251 = vmatprep.subr.mxu0 0.0
    %252 = vmatpush1.msra.mxu0 %v77
    %253 = vmatprep.subr.mxu0 0.0
    %254 = vmatpush1.msra.mxu0 %v78
    %255 = vmatprep.mubr.f32.mxu0 %v112
    %256 = vmatmul.mubr.f32.gmra.mrb[0].mxu0 %v111
    %v257 = vpop.f32.mrb[0].mxu0
    %v258 = vadd.f32 %v188, %v257
    %v259 = vpop.f32.mrb[0].mxu0
    %260 = vdwg.mxu0
    %261 = vst [vmem:[#allocation2] sm:$0xf] %v258
    %s262 = scalar_lea.vmem %s0, 16
    %v263 = vld [vmem:[%s262] sm:$0xf]
    %v264 = vld [vmem:[%s262 + $0x8] sm:$0xf]
    %v265 = vld [vmem:[%s262] sm:$0x1e]
    %v266 = vld [vmem:[%s262 + $0x8] sm:$0x1e]
    %v269 = vrot.slane %v265, 1
    %v270 = vrot.slane %v266, 1
    %273 = vmatprep.subr.mxu0 0.0
    %274 = vmatpush1.msra.mxu0 %v79
    %275 = vmatprep.subr.mxu0 0.0
    %276 = vmatpush1.msra.mxu0 %v80
    %277 = vmatprep.subr.mxu0 0.0
    %278 = vmatpush1.msra.mxu0 %v81
    %279 = vmatprep.subr.mxu0 0.0
    %280 = vmatpush1.msra.mxu0 %v82
    %281 = vmatprep.subr.mxu0 0.0
    %282 = vmatpush1.msra.mxu0 %v83
    %283 = vmatprep.subr.mxu0 0.0
    %284 = vmatpush1.msra.mxu0 %v84
    %285 = vmatprep.subr.mxu0 0.0
    %286 = vmatpush1.msra.mxu0 %v85
    %287 = vmatprep.subr.mxu0 0.0
    %288 = vmatpush1.msra.mxu0 %v86
    %289 = vmatprep.subr.mxu0 0.0
    %290 = vmatpush1.msra.mxu0 %v87
    %291 = vmatprep.subr.mxu0 0.0
    %292 = vmatpush1.msra.mxu0 %v88
    %293 = vmatprep.subr.mxu0 0.0
    %294 = vmatpush1.msra.mxu0 %v89
    %295 = vmatprep.subr.mxu0 0.0
    %296 = vmatpush1.msra.mxu0 %v90
    %297 = vmatprep.subr.mxu0 0.0
    %298 = vmatpush1.msra.mxu0 %v91
    %299 = vmatprep.subr.mxu0 0.0
    %300 = vmatpush1.msra.mxu0 %v92
    %301 = vmatprep.subr.mxu0 0.0
    %302 = vmatpush1.msra.mxu0 %v93
    %303 = vmatprep.subr.mxu0 0.0
    %304 = vmatpush1.msra.mxu0 %v94
    %305 = vmatprep.subr.mxu0 0.0
    %306 = vmatpush1.msra.mxu0 %v95
    %307 = vmatprep.subr.mxu0 0.0
    %308 = vmatpush1.msra.mxu0 %v96
    %309 = vmatprep.subr.mxu0 0.0
    %310 = vmatpush1.msra.mxu0 %v97
    %311 = vmatprep.subr.mxu0 0.0
    %312 = vmatpush1.msra.mxu0 %v98
    %313 = vmatprep.subr.mxu0 0.0
    %314 = vmatpush1.msra.mxu0 %v99
    %315 = vmatprep.subr.mxu0 0.0
    %316 = vmatpush1.msra.mxu0 %v100
    %317 = vmatprep.subr.mxu0 0.0
    %318 = vmatpush1.msra.mxu0 %v101
    %319 = vmatprep.subr.mxu0 0.0
    %320 = vmatpush1.msra.mxu0 %v102
    %321 = vmatprep.subr.mxu0 0.0
    %322 = vmatpush1.msra.mxu0 %v103
    %323 = vmatprep.subr.mxu0 0.0
    %324 = vmatpush1.msra.mxu0 %v104
    %325 = vmatprep.subr.mxu0 0.0
    %326 = vmatpush1.msra.mxu0 %v105
    %327 = vmatprep.subr.mxu0 0.0
    %328 = vmatpush1.msra.mxu0 %v106
    %329 = vmatprep.subr.mxu0 0.0
    %330 = vmatpush1.msra.mxu0 %v107
    %331 = vmatprep.subr.mxu0 0.0
    %332 = vmatpush1.msra.mxu0 %v108
    %333 = vmatprep.subr.mxu0 0.0
    %334 = vmatpush1.msra.mxu0 %v109
    %335 = vmatprep.subr.mxu0 0.0
    %336 = vmatpush1.msra.mxu0 %v110
    %337 = vmatprep.mubr.f32.mxu0 %v270
    %338 = vmatmul.mubr.f32.gmra.mrb[0].mxu0 %v269
    %v339 = vpop.f32.mrb[0].mxu0
    %v340 = vadd.f32 0.0, %v339
    %v341 = vpop.f32.mrb[0].mxu0
    %342 = vdwg.mxu0
    %343 = vmatprep.subr.mxu0 0.0
    %344 = vmatpush1.msra.mxu0 %v47
    %345 = vmatprep.subr.mxu0 0.0
    %346 = vmatpush1.msra.mxu0 %v48
    %347 = vmatprep.subr.mxu0 0.0
    %348 = vmatpush1.msra.mxu0 %v49
    %349 = vmatprep.subr.mxu0 0.0
    %350 = vmatpush1.msra.mxu0 %v50
    %351 = vmatprep.subr.mxu0 0.0
    %352 = vmatpush1.msra.mxu0 %v51
    %353 = vmatprep.subr.mxu0 0.0
    %354 = vmatpush1.msra.mxu0 %v52
    %355 = vmatprep.subr.mxu0 0.0
    %356 = vmatpush1.msra.mxu0 %v53
    %357 = vmatprep.subr.mxu0 0.0
    %358 = vmatpush1.msra.mxu0 %v54
    %359 = vmatprep.subr.mxu0 0.0
    %360 = vmatpush1.msra.mxu0 %v55
    %361 = vmatprep.subr.mxu0 0.0
    %362 = vmatpush1.msra.mxu0 %v56
    %363 = vmatprep.subr.mxu0 0.0
    %364 = vmatpush1.msra.mxu0 %v57
    %365 = vmatprep.subr.mxu0 0.0
    %366 = vmatpush1.msra.mxu0 %v58
    %367 = vmatprep.subr.mxu0 0.0
    %368 = vmatpush1.msra.mxu0 %v59
    %369 = vmatprep.subr.mxu0 0.0
    %370 = vmatpush1.msra.mxu0 %v60
    %371 = vmatprep.subr.mxu0 0.0
    %372 = vmatpush1.msra.mxu0 %v61
    %373 = vmatprep.subr.mxu0 0.0
    %374 = vmatpush1.msra.mxu0 %v62
    %375 = vmatprep.subr.mxu0 0.0
    %376 = vmatpush1.msra.mxu0 %v63
    %377 = vmatprep.subr.mxu0 0.0
    %378 = vmatpush1.msra.mxu0 %v64
    %379 = vmatprep.subr.mxu0 0.0
    %380 = vmatpush1.msra.mxu0 %v65
    %381 = vmatprep.subr.mxu0 0.0
    %382 = vmatpush1.msra.mxu0 %v66
    %383 = vmatprep.subr.mxu0 0.0
    %384 = vmatpush1.msra.mxu0 %v67
    %385 = vmatprep.subr.mxu0 0.0
    %386 = vmatpush1.msra.mxu0 %v68
    %387 = vmatprep.subr.mxu0 0.0
    %388 = vmatpush1.msra.mxu0 %v69
    %389 = vmatprep.subr.mxu0 0.0
    %390 = vmatpush1.msra.mxu0 %v70
    %391 = vmatprep.subr.mxu0 0.0
    %392 = vmatpush1.msra.mxu0 %v71
    %393 = vmatprep.subr.mxu0 0.0
    %394 = vmatpush1.msra.mxu0 %v72
    %395 = vmatprep.subr.mxu0 0.0
    %396 = vmatpush1.msra.mxu0 %v73
    %397 = vmatprep.subr.mxu0 0.0
    %398 = vmatpush1.msra.mxu0 %v74
    %399 = vmatprep.subr.mxu0 0.0
    %400 = vmatpush1.msra.mxu0 %v75
    %401 = vmatprep.subr.mxu0 0.0
    %402 = vmatpush1.msra.mxu0 %v76
    %403 = vmatprep.subr.mxu0 0.0
    %404 = vmatpush1.msra.mxu0 %v77
    %405 = vmatprep.subr.mxu0 0.0
    %406 = vmatpush1.msra.mxu0 %v78
    %407 = vmatprep.mubr.f32.mxu0 %v264
    %408 = vmatmul.mubr.f32.gmra.mrb[0].mxu0 %v263
    %v409 = vpop.f32.mrb[0].mxu0
    %v410 = vadd.f32 %v340, %v409
    %v411 = vpop.f32.mrb[0].mxu0
    %412 = vdwg.mxu0
    %s413 = scalar_lea.vmem [#allocation2], 4
    %414 = vst [vmem:[%s413] sm:$0xf] %v410
    %v415 = vld [vmem:[#allocation2] sm:$0xf]
    %v416 = vld [vmem:[#allocation2 + $0x4] sm:$0xf]
    %v417 = vld [vmem:[#allocation3] sm:$0x1]
    %v419 = vlaneseq
    %v420 = vshrl.u32 %v419, 7
    %v421 = vsub.s32 0, %v420
    %v422 = vrot.slane %v417, %v421
    %v424 = vadd.f32 %v415, %v422
    %v425 = vadd.f32 %v416, %v422
    %vm426 = vcmask 1043456
    %v427 = vsel %vm426, %v424, 0.0
    %v428 = vrot.slane %v427, 4
    %v429 = vadd.f32 %v427, %v428
    %v430 = vrot.slane %v429, 2
    %v431 = vadd.f32 %v429, %v430
    %v432 = vrot.slane %v431, 1
    %v433 = vadd.f32 %v431, %v432
    %v434 = vsel %vm426, %v425, 0.0
    %v435 = vrot.slane %v434, 4
    %v436 = vadd.f32 %v434, %v435
    %v437 = vrot.slane %v436, 2
    %v438 = vadd.f32 %v436, %v437
    %v439 = vrot.slane %v438, 1
    %v440 = vadd.f32 %v438, %v439
    %v441 = vadd.f32 %v433, %v440
    %v442 = vrcp.pop 8.0
    %v443 = vmul.f32 %v441, %v442
    %v444 = vsub.f32 %v424, %v443
    %v445 = vsub.f32 %v425, %v443
    %v446 = vmul.f32 %v444, %v444
    %v447 = vmul.f32 %v445, %v445
    %v448 = vsel %vm426, %v446, 0.0
    %v449 = vrot.slane %v448, 4
    %v450 = vadd.f32 %v448, %v449
    %v451 = vrot.slane %v450, 2
    %v452 = vadd.f32 %v450, %v451
    %v453 = vrot.slane %v452, 1
    %v454 = vadd.f32 %v452, %v453
    %v455 = vsel %vm426, %v447, 0.0
    %v456 = vrot.slane %v455, 4
    %v457 = vadd.f32 %v455, %v456
    %v458 = vrot.slane %v457, 2
    %v459 = vadd.f32 %v457, %v458
    %v460 = vrot.slane %v459, 1
    %v461 = vadd.f32 %v459, %v460
    %v462 = vadd.f32 %v454, %v461
    %v463 = vmul.f32 %v462, %v442
    %v464 = vadd.f32 %v463, 1e-05
    %v465 = vrsqrt.pop %v464
    %v466 = vmul.f32 %v444, %v465
    %v467 = vmul.f32 %v445, %v465
    %v468 = vld [vmem:[#allocation5] sm:$0x1]
    %v470 = vlaneseq
    %v471 = vshrl.u32 %v470, 7
    %v472 = vsub.s32 0, %v471
    %v473 = vrot.slane %v468, %v472
    %v475 = vmul.f32 %v466, %v473
    %v476 = vmul.f32 %v467, %v473
    %v477 = vld [vmem:[%s5] sm:$0x1]
    %v479 = vlaneseq
    %v480 = vshrl.u32 %v479, 7
    %v481 = vsub.s32 0, %v480
    %v482 = vrot.slane %v477, %v481
    %v484 = vadd.f32 %v475, %v482
    %v485 = vadd.f32 %v476, %v482
    %vm486 = vcmp.ge.f32.partialorder %v484, 0.0
    %vm487 = vcmp.ge.f32.partialorder %v485, 0.0
    %v488 = vmul.f32 %v484, 0.2
    %v489 = vmul.f32 %v485, 0.2
    %v490 = vsel %vm486, %v484, %v488
    %v491 = vsel %vm487, %v485, %v489
    %492 = vst [vmem:[%s6] sm:$0x3f] 0.0
    %493 = vst [vmem:[%s6 + $0x8] sm:$0x3f] 0.0
    %494 = vst [vmem:[%s6 + $0x1] sm:$0xf] %v490
    %495 = vst [vmem:[%s6 + $0x9] sm:$0xf] %v491
    // Predicated region
    $region34: #{conv_encoder_forward.4} parent=1 // pred_check
      _
    $region35: #{conv_encoder_forward.4} parent=1 // pred_check_branch
      %497 = sbr.rel (0) target = $region37
    $region36: #{conv_encoder_forward.4} parent=1 // pred_region
      _
    $region37: #{conv_encoder_forward.4} parent=1 // pred_fallthru
      _
    // Predicated region
    $region38: #{conv_encoder_forward.4} parent=1 // pred_check
      _
    $region39: #{conv_encoder_forward.4} parent=1 // pred_check_branch
      %499 = sbr.rel (0) target = $region41
    $region40: #{conv_encoder_forward.4} parent=1 // pred_region
      _
    $region41: #{conv_encoder_forward.4} parent=1 // pred_fallthru
      _
    %500 = vsyncpa [#allocation4], 1
    %501 = vsyncpa [#allocation6], 1

</llo_original>
